<compile_context>
chip_gen: v6e
topology: v6e:2x2x1
jax: 0.10.0
libtpu: 0.0.40
codegen_flags: <defaults>
</compile_context>

<pallas_src>
import functools

import jax
import jax.numpy as jnp
from jax.experimental import pallas as pl
from jax.experimental.pallas import tpu as pltpu

BN_EPS = 1e-5
LANE = 128


# ---------------------------------------------------------------------------
# Fused kernel: (Linear -> BN(batch stats) -> ReLU) x3 -> Linear (padded head)
# ---------------------------------------------------------------------------
def fc_fused_kernel(
    x_ref,
    w1_ref, g1_ref, be1_ref,
    w2_ref, g2_ref, be2_ref,
    w3_ref, g3_ref, be3_ref,
    w4_ref, b4_ref,
    o_ref,
):
    def linear_bn_relu(x_bf16, w_ref, g_ref, b_ref):
        # Linear bias omitted: a per-feature constant is exactly cancelled by
        # the batch-mean subtraction below (training-mode BN).
        # bf16 operands into the MXU, f32 accumulation.
        y = jnp.dot(x_bf16, w_ref[...], preferred_element_type=jnp.float32)
        mean = jnp.mean(y, axis=0, keepdims=True)              # f32 batch mean
        yc = y - mean                                          # reused for var
        var = jnp.mean(yc * yc, axis=0, keepdims=True)         # biased var, f32
        scale = g_ref[...] * jax.lax.rsqrt(var + BN_EPS)       # EUP rsqrt, row-op
        # Folded BN affine + ReLU: two full-tile VPU ops + max.
        h = jnp.maximum(yc * scale + b_ref[...], 0.0)
        return h.astype(jnp.bfloat16)                          # bf16 into next dot

    h = linear_bn_relu(x_ref[...], w1_ref, g1_ref, be1_ref)
    h = linear_bn_relu(h, w2_ref, g2_ref, be2_ref)
    h = linear_bn_relu(h, w3_ref, g3_ref, be3_ref)
    # Dropout(p=0.0) == identity. Final classifier (lane-dense padded head).
    o_ref[...] = (
        jnp.dot(h, w4_ref[...], preferred_element_type=jnp.float32) + b4_ref[...]
    )


# ---------------------------------------------------------------------------
# Wrapper
# ---------------------------------------------------------------------------
@functools.partial(jax.jit, static_argnames=("num_classes",))
def fc_forward(x, params, *, num_classes):
    b = x.shape[0]
    xf = x.reshape(b, -1).astype(jnp.bfloat16)        # x.view(b, -1), bf16 operand

    (w1, _b1, g1, be1), (w2, _b2, g2, be2), (w3, _b3, g3, be3) = params["blocks"]
    w4p, b4p = params["w_out"], params["b_out"]        # already lane-padded at init
    n_pad = w4p.shape[1]

    args = (xf, w1, g1, be1, w2, g2, be2, w3, g3, be3, w4p, b4p)

    out = pl.pallas_call(
        fc_fused_kernel,
        out_shape=jax.ShapeDtypeStruct((b, n_pad), jnp.float32),
        grid_spec=pltpu.PrefetchScalarGridSpec(
            num_scalar_prefetch=0,
            grid=(1,),
            in_specs=[pl.BlockSpec(a.shape, lambda i: (0, 0)) for a in args],
            out_specs=pl.BlockSpec((b, n_pad), lambda i: (0, 0)),
        ),
        compiler_params=pltpu.CompilerParams(
            dimension_semantics=("arbitrary",),
            vmem_limit_bytes=32 * 1024 * 1024,
        ),
    )(*args)

    return out[:, :num_classes]  # drop the lane padding -> (B, num_classes)


# ---------------------------------------------------------------------------
# Deterministic parameter init (PyTorch nn.Linear default: U(-1/sqrt(fan_in), ...))
# Weights stored bf16 (MXU operands); BN params and biases f32.
# Classifier head is padded to a 128-lane-dense output ONCE here.
# ---------------------------------------------------------------------------
def init_params(key, input_dim, hidden_dim, num_classes):
    def init_linear(k, fan_in, fan_out):
        k1, k2 = jax.random.split(k)
        bound = 1.0 / float(fan_in) ** 0.5
        w = jax.random.uniform(k1, (fan_in, fan_out), jnp.float32, -bound, bound)
        b = jax.random.uniform(k2, (1, fan_out), jnp.float32, -bound, bound)
        return w.astype(jnp.bfloat16), b

    keys = jax.random.split(key, 4)
    dims = [input_dim, hidden_dim, hidden_dim, hidden_dim]
    blocks = []
    for i in range(3):
        w, b = init_linear(keys[i], dims[i], dims[i + 1])
        gamma = jnp.ones((1, hidden_dim), jnp.float32)
        beta = jnp.zeros((1, hidden_dim), jnp.float32)
        blocks.append((w, b, gamma, beta))
    w_out, b_out = init_linear(keys[3], hidden_dim, num_classes)

    n_pad = max(LANE, ((num_classes + LANE - 1) // LANE) * LANE)
    w_out = jnp.pad(w_out, ((0, 0), (0, n_pad - num_classes)))
    b_out = jnp.pad(b_out, ((0, 0), (0, n_pad - num_classes)))
    return {"blocks": blocks, "w_out": w_out, "b_out": b_out}


# ---------------------------------------------------------------------------
# Pure-JAX reference (same bf16-operand / f32-accumulate dot precision,
# includes the Linear biases; training-mode BN cancels them).
# ---------------------------------------------------------------------------
def fc_forward_ref(x, params, num_classes):
    b = x.shape[0]
    h = x.reshape(b, -1).astype(jnp.float32)
    for (w, bias, gamma, beta) in params["blocks"]:
        y = jnp.dot(h.astype(jnp.bfloat16), w,
                    preferred_element_type=jnp.float32) + bias
        mean = jnp.mean(y, axis=0, keepdims=True)
        var = jnp.mean(jnp.square(y - mean), axis=0, keepdims=True)
        y = (y - mean) * jax.lax.rsqrt(var + BN_EPS)
        h = jnp.maximum(gamma * y + beta, 0.0)
    logits = jnp.dot(h.astype(jnp.bfloat16), params["w_out"],
                     preferred_element_type=jnp.float32) + params["b_out"]
    return logits[:, :num_classes]


if __name__ == "__main__":
    # Small shapes consistent with the module (input_dim = C*H*W).
    B, C, Hs, Ws = 8, 4, 16, 16
    INPUT_DIM = C * Hs * Ws      # 1024
    HIDDEN = 256
    NUM_CLASSES = 10

    key = jax.random.PRNGKey(0)
    k_x, k_p = jax.random.split(key)
    x = jax.random.normal(k_x, (B, C, Hs, Ws), jnp.float32)   # NCHW
    params = init_params(k_p, INPUT_DIM, HIDDEN, NUM_CLASSES)

    logits = fc_forward(x, params, num_classes=NUM_CLASSES)
    logits = jax.block_until_ready(logits)
    out = (logits, None)  # matches the PyTorch module's (x, None) return

    ref = fc_forward_ref(x, params, NUM_CLASSES)
    assert out[0].shape == (B, NUM_CLASSES)
    assert jnp.allclose(out[0], ref, atol=2e-3, rtol=2e-3), "mismatch vs reference"

    print("KERNEL_OK")
</pallas_src>

<mosaic_0001>
module attributes {stable_mosaic.version = 11 : i64} {
  func.func @fc_fused_kernel(%arg0: i32, %arg1: memref<8x1024xbf16, #tpu.memory_space<vmem>>, %arg2: memref<1024x256xbf16, #tpu.memory_space<vmem>>, %arg3: memref<1x256xf32, #tpu.memory_space<vmem>>, %arg4: memref<1x256xf32, #tpu.memory_space<vmem>>, %arg5: memref<256x256xbf16, #tpu.memory_space<vmem>>, %arg6: memref<1x256xf32, #tpu.memory_space<vmem>>, %arg7: memref<1x256xf32, #tpu.memory_space<vmem>>, %arg8: memref<256x256xbf16, #tpu.memory_space<vmem>>, %arg9: memref<1x256xf32, #tpu.memory_space<vmem>>, %arg10: memref<1x256xf32, #tpu.memory_space<vmem>>, %arg11: memref<256x128xbf16, #tpu.memory_space<vmem>>, %arg12: memref<1x128xf32, #tpu.memory_space<vmem>>, %arg13: memref<8x128xf32, #tpu.memory_space<vmem>>) attributes {dimension_semantics = [#tpu.dimension_semantics<arbitrary>], iteration_bounds = array<i64: 1>, scalar_prefetch = 0 : i64, scratch_operands = 0 : i64, tpu.core_type = #tpu.core_type<tc>, window_params = [{pipeline_mode = #tpu.pipeline_mode<synchronous>, transform_indices = @transform_0, window_bounds = array<i64: 8, 1024>}, {pipeline_mode = #tpu.pipeline_mode<synchronous>, transform_indices = @transform_1, window_bounds = array<i64: 1024, 256>}, {pipeline_mode = #tpu.pipeline_mode<synchronous>, transform_indices = @transform_2, window_bounds = array<i64: 1, 256>}, {pipeline_mode = #tpu.pipeline_mode<synchronous>, transform_indices = @transform_3, window_bounds = array<i64: 1, 256>}, {pipeline_mode = #tpu.pipeline_mode<synchronous>, transform_indices = @transform_4, window_bounds = array<i64: 256, 256>}, {pipeline_mode = #tpu.pipeline_mode<synchronous>, transform_indices = @transform_5, window_bounds = array<i64: 1, 256>}, {pipeline_mode = #tpu.pipeline_mode<synchronous>, transform_indices = @transform_6, window_bounds = array<i64: 1, 256>}, {pipeline_mode = #tpu.pipeline_mode<synchronous>, transform_indices = @transform_7, window_bounds = array<i64: 256, 256>}, {pipeline_mode = #tpu.pipeline_mode<synchronous>, transform_indices = @transform_8, window_bounds = array<i64: 1, 256>}, {pipeline_mode = #tpu.pipeline_mode<synchronous>, transform_indices = @transform_9, window_bounds = array<i64: 1, 256>}, {pipeline_mode = #tpu.pipeline_mode<synchronous>, transform_indices = @transform_10, window_bounds = array<i64: 256, 128>}, {pipeline_mode = #tpu.pipeline_mode<synchronous>, transform_indices = @transform_11, window_bounds = array<i64: 1, 128>}, {pipeline_mode = #tpu.pipeline_mode<synchronous>, transform_indices = @transform_12, window_bounds = array<i64: 8, 128>}]} {
    %c0 = arith.constant 0 : index
    %c0_0 = arith.constant 0 : index
    %0 = vector.load %arg1[%c0, %c0_0] : memref<8x1024xbf16, #tpu.memory_space<vmem>>, vector<8x1024xbf16>
    %c0_1 = arith.constant 0 : index
    %c0_2 = arith.constant 0 : index
    %1 = vector.load %arg2[%c0_1, %c0_2] : memref<1024x256xbf16, #tpu.memory_space<vmem>>, vector<1024x256xbf16>
    %cst = arith.constant dense<0.000000e+00> : vector<8x256xf32>
    %2 = tpu.matmul %0, %1, %cst {dimension_numbers = #tpu.dot_dimension_numbers<[1], [0], [0], [1], [0, 0, 1, 1], [], []>} : vector<8x1024xbf16>, vector<1024x256xbf16>, vector<8x256xf32> -> vector<8x256xf32>
    %cst_3 = arith.constant dense<0.000000e+00> : vector<256xf32>
    %3 = vector.multi_reduction <add>, %2, %cst_3 [0] : vector<8x256xf32> to vector<256xf32>
    %4 = vector.shape_cast %3 : vector<256xf32> to vector<1x256xf32>
    %cst_4 = arith.constant 8.000000e+00 : f32
    %5 = vector.broadcast %cst_4 : f32 to vector<1x256xf32>
    %6 = arith.divf %4, %5 : vector<1x256xf32>
    %7 = vector.broadcast %6 : vector<1x256xf32> to vector<8x256xf32>
    %8 = arith.subf %2, %7 : vector<8x256xf32>
    %9 = arith.mulf %8, %8 : vector<8x256xf32>
    %cst_5 = arith.constant dense<0.000000e+00> : vector<256xf32>
    %10 = vector.multi_reduction <add>, %9, %cst_5 [0] : vector<8x256xf32> to vector<256xf32>
    %11 = vector.shape_cast %10 : vector<256xf32> to vector<1x256xf32>
    %cst_6 = arith.constant 8.000000e+00 : f32
    %12 = vector.broadcast %cst_6 : f32 to vector<1x256xf32>
    %13 = arith.divf %11, %12 : vector<1x256xf32>
    %c0_7 = arith.constant 0 : index
    %c0_8 = arith.constant 0 : index
    %14 = vector.load %arg3[%c0_7, %c0_8] : memref<1x256xf32, #tpu.memory_space<vmem>>, vector<1x256xf32>
    %cst_9 = arith.constant 9.99999974E-6 : f32
    %15 = vector.broadcast %cst_9 : f32 to vector<1x256xf32>
    %16 = arith.addf %13, %15 : vector<1x256xf32>
    %17 = math.rsqrt %16 : vector<1x256xf32>
    %18 = arith.mulf %14, %17 : vector<1x256xf32>
    %19 = vector.broadcast %18 : vector<1x256xf32> to vector<8x256xf32>
    %20 = arith.mulf %8, %19 : vector<8x256xf32>
    %c0_10 = arith.constant 0 : index
    %c0_11 = arith.constant 0 : index
    %21 = vector.load %arg4[%c0_10, %c0_11] : memref<1x256xf32, #tpu.memory_space<vmem>>, vector<1x256xf32>
    %22 = vector.broadcast %21 : vector<1x256xf32> to vector<8x256xf32>
    %23 = arith.addf %20, %22 : vector<8x256xf32>
    %cst_12 = arith.constant 0.000000e+00 : f32
    %24 = vector.broadcast %cst_12 : f32 to vector<8x256xf32>
    %25 = arith.maximumf %23, %24 : vector<8x256xf32>
    %26 = arith.truncf %25 : vector<8x256xf32> to vector<8x256xbf16>
    %c0_13 = arith.constant 0 : index
    %c0_14 = arith.constant 0 : index
    %27 = vector.load %arg5[%c0_13, %c0_14] : memref<256x256xbf16, #tpu.memory_space<vmem>>, vector<256x256xbf16>
    %cst_15 = arith.constant dense<0.000000e+00> : vector<8x256xf32>
    %28 = tpu.matmul %26, %27, %cst_15 {dimension_numbers = #tpu.dot_dimension_numbers<[1], [0], [0], [1], [0, 0, 1, 1], [], []>} : vector<8x256xbf16>, vector<256x256xbf16>, vector<8x256xf32> -> vector<8x256xf32>
    %cst_16 = arith.constant dense<0.000000e+00> : vector<256xf32>
    %29 = vector.multi_reduction <add>, %28, %cst_16 [0] : vector<8x256xf32> to vector<256xf32>
    %30 = vector.shape_cast %29 : vector<256xf32> to vector<1x256xf32>
    %cst_17 = arith.constant 8.000000e+00 : f32
    %31 = vector.broadcast %cst_17 : f32 to vector<1x256xf32>
    %32 = arith.divf %30, %31 : vector<1x256xf32>
    %33 = vector.broadcast %32 : vector<1x256xf32> to vector<8x256xf32>
    %34 = arith.subf %28, %33 : vector<8x256xf32>
    %35 = arith.mulf %34, %34 : vector<8x256xf32>
    %cst_18 = arith.constant dense<0.000000e+00> : vector<256xf32>
    %36 = vector.multi_reduction <add>, %35, %cst_18 [0] : vector<8x256xf32> to vector<256xf32>
    %37 = vector.shape_cast %36 : vector<256xf32> to vector<1x256xf32>
    %cst_19 = arith.constant 8.000000e+00 : f32
    %38 = vector.broadcast %cst_19 : f32 to vector<1x256xf32>
    %39 = arith.divf %37, %38 : vector<1x256xf32>
    %c0_20 = arith.constant 0 : index
    %c0_21 = arith.constant 0 : index
    %40 = vector.load %arg6[%c0_20, %c0_21] : memref<1x256xf32, #tpu.memory_space<vmem>>, vector<1x256xf32>
    %cst_22 = arith.constant 9.99999974E-6 : f32
    %41 = vector.broadcast %cst_22 : f32 to vector<1x256xf32>
    %42 = arith.addf %39, %41 : vector<1x256xf32>
    %43 = math.rsqrt %42 : vector<1x256xf32>
    %44 = arith.mulf %40, %43 : vector<1x256xf32>
    %45 = vector.broadcast %44 : vector<1x256xf32> to vector<8x256xf32>
    %46 = arith.mulf %34, %45 : vector<8x256xf32>
    %c0_23 = arith.constant 0 : index
    %c0_24 = arith.constant 0 : index
    %47 = vector.load %arg7[%c0_23, %c0_24] : memref<1x256xf32, #tpu.memory_space<vmem>>, vector<1x256xf32>
    %48 = vector.broadcast %47 : vector<1x256xf32> to vector<8x256xf32>
    %49 = arith.addf %46, %48 : vector<8x256xf32>
    %cst_25 = arith.constant 0.000000e+00 : f32
    %50 = vector.broadcast %cst_25 : f32 to vector<8x256xf32>
    %51 = arith.maximumf %49, %50 : vector<8x256xf32>
    %52 = arith.truncf %51 : vector<8x256xf32> to vector<8x256xbf16>
    %c0_26 = arith.constant 0 : index
    %c0_27 = arith.constant 0 : index
    %53 = vector.load %arg8[%c0_26, %c0_27] : memref<256x256xbf16, #tpu.memory_space<vmem>>, vector<256x256xbf16>
    %cst_28 = arith.constant dense<0.000000e+00> : vector<8x256xf32>
    %54 = tpu.matmul %52, %53, %cst_28 {dimension_numbers = #tpu.dot_dimension_numbers<[1], [0], [0], [1], [0, 0, 1, 1], [], []>} : vector<8x256xbf16>, vector<256x256xbf16>, vector<8x256xf32> -> vector<8x256xf32>
    %cst_29 = arith.constant dense<0.000000e+00> : vector<256xf32>
    %55 = vector.multi_reduction <add>, %54, %cst_29 [0] : vector<8x256xf32> to vector<256xf32>
    %56 = vector.shape_cast %55 : vector<256xf32> to vector<1x256xf32>
    %cst_30 = arith.constant 8.000000e+00 : f32
    %57 = vector.broadcast %cst_30 : f32 to vector<1x256xf32>
    %58 = arith.divf %56, %57 : vector<1x256xf32>
    %59 = vector.broadcast %58 : vector<1x256xf32> to vector<8x256xf32>
    %60 = arith.subf %54, %59 : vector<8x256xf32>
    %61 = arith.mulf %60, %60 : vector<8x256xf32>
    %cst_31 = arith.constant dense<0.000000e+00> : vector<256xf32>
    %62 = vector.multi_reduction <add>, %61, %cst_31 [0] : vector<8x256xf32> to vector<256xf32>
    %63 = vector.shape_cast %62 : vector<256xf32> to vector<1x256xf32>
    %cst_32 = arith.constant 8.000000e+00 : f32
    %64 = vector.broadcast %cst_32 : f32 to vector<1x256xf32>
    %65 = arith.divf %63, %64 : vector<1x256xf32>
    %c0_33 = arith.constant 0 : index
    %c0_34 = arith.constant 0 : index
    %66 = vector.load %arg9[%c0_33, %c0_34] : memref<1x256xf32, #tpu.memory_space<vmem>>, vector<1x256xf32>
    %cst_35 = arith.constant 9.99999974E-6 : f32
    %67 = vector.broadcast %cst_35 : f32 to vector<1x256xf32>
    %68 = arith.addf %65, %67 : vector<1x256xf32>
    %69 = math.rsqrt %68 : vector<1x256xf32>
    %70 = arith.mulf %66, %69 : vector<1x256xf32>
    %71 = vector.broadcast %70 : vector<1x256xf32> to vector<8x256xf32>
    %72 = arith.mulf %60, %71 : vector<8x256xf32>
    %c0_36 = arith.constant 0 : index
    %c0_37 = arith.constant 0 : index
    %73 = vector.load %arg10[%c0_36, %c0_37] : memref<1x256xf32, #tpu.memory_space<vmem>>, vector<1x256xf32>
    %74 = vector.broadcast %73 : vector<1x256xf32> to vector<8x256xf32>
    %75 = arith.addf %72, %74 : vector<8x256xf32>
    %cst_38 = arith.constant 0.000000e+00 : f32
    %76 = vector.broadcast %cst_38 : f32 to vector<8x256xf32>
    %77 = arith.maximumf %75, %76 : vector<8x256xf32>
    %78 = arith.truncf %77 : vector<8x256xf32> to vector<8x256xbf16>
    %c0_39 = arith.constant 0 : index
    %c0_40 = arith.constant 0 : index
    %79 = vector.load %arg11[%c0_39, %c0_40] : memref<256x128xbf16, #tpu.memory_space<vmem>>, vector<256x128xbf16>
    %cst_41 = arith.constant dense<0.000000e+00> : vector<8x128xf32>
    %80 = tpu.matmul %78, %79, %cst_41 {dimension_numbers = #tpu.dot_dimension_numbers<[1], [0], [0], [1], [0, 0, 1, 1], [], []>} : vector<8x256xbf16>, vector<256x128xbf16>, vector<8x128xf32> -> vector<8x128xf32>
    %c0_42 = arith.constant 0 : index
    %c0_43 = arith.constant 0 : index
    %81 = vector.load %arg12[%c0_42, %c0_43] : memref<1x128xf32, #tpu.memory_space<vmem>>, vector<1x128xf32>
    %82 = vector.broadcast %81 : vector<1x128xf32> to vector<8x128xf32>
    %83 = arith.addf %80, %82 : vector<8x128xf32>
    %c0_44 = arith.constant 0 : index
    %c0_45 = arith.constant 0 : index
    %84 = vector.load %arg13[%c0_44, %c0_45] : memref<8x128xf32, #tpu.memory_space<vmem>>, vector<8x128xf32>
    tpu.vector_store %arg13[%c0_44, %c0_45], %83 {strides = array<i32>} : memref<8x128xf32, #tpu.memory_space<vmem>>, vector<8x128xf32>,
    return
  }
  func.func @transform_0(%arg0: i32) -> (i32, i32) {
    %c0_i32 = arith.constant 0 : i32
    %c0_i32_0 = arith.constant 0 : i32
    %c0_i32_1 = arith.constant 0 : i32
    return %c0_i32, %c0_i32_0 : i32, i32
  }
  func.func @transform_1(%arg0: i32) -> (i32, i32) {
    %c0_i32 = arith.constant 0 : i32
    %c0_i32_0 = arith.constant 0 : i32
    %c0_i32_1 = arith.constant 0 : i32
    return %c0_i32, %c0_i32_0 : i32, i32
  }
  func.func @transform_2(%arg0: i32) -> (i32, i32) {
    %c0_i32 = arith.constant 0 : i32
    %c0_i32_0 = arith.constant 0 : i32
    %c0_i32_1 = arith.constant 0 : i32
    return %c0_i32, %c0_i32_0 : i32, i32
  }
  func.func @transform_3(%arg0: i32) -> (i32, i32) {
    %c0_i32 = arith.constant 0 : i32
    %c0_i32_0 = arith.constant 0 : i32
    %c0_i32_1 = arith.constant 0 : i32
    return %c0_i32, %c0_i32_0 : i32, i32
  }
  func.func @transform_4(%arg0: i32) -> (i32, i32) {
    %c0_i32 = arith.constant 0 : i32
    %c0_i32_0 = arith.constant 0 : i32
    %c0_i32_1 = arith.constant 0 : i32
    return %c0_i32, %c0_i32_0 : i32, i32
  }
  func.func @transform_5(%arg0: i32) -> (i32, i32) {
    %c0_i32 = arith.constant 0 : i32
    %c0_i32_0 = arith.constant 0 : i32
    %c0_i32_1 = arith.constant 0 : i32
    return %c0_i32, %c0_i32_0 : i32, i32
  }
  func.func @transform_6(%arg0: i32) -> (i32, i32) {
    %c0_i32 = arith.constant 0 : i32
    %c0_i32_0 = arith.constant 0 : i32
    %c0_i32_1 = arith.constant 0 : i32
    return %c0_i32, %c0_i32_0 : i32, i32
  }
  func.func @transform_7(%arg0: i32) -> (i32, i32) {
    %c0_i32 = arith.constant 0 : i32
    %c0_i32_0 = arith.constant 0 : i32
    %c0_i32_1 = arith.constant 0 : i32
    return %c0_i32, %c0_i32_0 : i32, i32
  }
  func.func @transform_8(%arg0: i32) -> (i32, i32) {
    %c0_i32 = arith.constant 0 : i32
    %c0_i32_0 = arith.constant 0 : i32
    %c0_i32_1 = arith.constant 0 : i32
    return %c0_i32, %c0_i32_0 : i32, i32
  }
  func.func @transform_9(%arg0: i32) -> (i32, i32) {
    %c0_i32 = arith.constant 0 : i32
    %c0_i32_0 = arith.constant 0 : i32
    %c0_i32_1 = arith.constant 0 : i32
    return %c0_i32, %c0_i32_0 : i32, i32
  }
  func.func @transform_10(%arg0: i32) -> (i32, i32) {
    %c0_i32 = arith.constant 0 : i32
    %c0_i32_0 = arith.constant 0 : i32
    %c0_i32_1 = arith.constant 0 : i32
    return %c0_i32, %c0_i32_0 : i32, i32
  }
  func.func @transform_11(%arg0: i32) -> (i32, i32) {
    %c0_i32 = arith.constant 0 : i32
    %c0_i32_0 = arith.constant 0 : i32
    %c0_i32_1 = arith.constant 0 : i32
    return %c0_i32, %c0_i32_0 : i32, i32
  }
  func.func @transform_12(%arg0: i32) -> (i32, i32) {
    %c0_i32 = arith.constant 0 : i32
    %c0_i32_0 = arith.constant 0 : i32
    %c0_i32_1 = arith.constant 0 : i32
    return %c0_i32, %c0_i32_0 : i32, i32
  }
}

</mosaic_0001>

<llo_original>
// kernel: fc_forward.1
$region0: #{fc_forward.1}
  #allocation0 [shape = 'u32[]', space=smem, size = 0x4, offset = 0x4, fixed_abs, tag = 'smem constant byte address 0x4 - core index']
  #allocation1 [shape = 'u32[144,128]{1,0:T(1,128)}', space=vmem, size = 0x12000, scoped, tag = 'internal scratch']
  %s0 = inlined_call_operand.vmem [shape: bf16[8,1024], index: 0, kind: input, shape index: {}]
  %s1 = inlined_call_operand.vmem [shape: bf16[1024,256], index: 1, kind: input, shape index: {}]
  %s2 = inlined_call_operand.vmem [shape: f32[1,256], index: 2, kind: input, shape index: {}]
  %s3 = inlined_call_operand.vmem [shape: f32[1,256], index: 3, kind: input, shape index: {}]
  %s4 = inlined_call_operand.hbm [shape: bf16[256,256], index: 4, kind: input, shape index: {}]
  %s5 = inlined_call_operand.vmem [shape: f32[1,256], index: 5, kind: input, shape index: {}]
  %s6 = inlined_call_operand.vmem [shape: f32[1,256], index: 6, kind: input, shape index: {}]
  %s7 = inlined_call_operand.hbm [shape: bf16[256,256], index: 7, kind: input, shape index: {}]
  %s8 = inlined_call_operand.vmem [shape: f32[1,256], index: 8, kind: input, shape index: {}]
  %s9 = inlined_call_operand.vmem [shape: f32[1,256], index: 9, kind: input, shape index: {}]
  %s10 = inlined_call_operand.hbm [shape: bf16[256,128], index: 10, kind: input, shape index: {}]
  %s11 = inlined_call_operand.vmem [shape: f32[1,128], index: 11, kind: input, shape index: {}]
  %s12 = inlined_call_operand.hbm [shape: f32[8,128], index: 12, kind: output, shape index: {}]
  %s13 = sld [smem:[#allocation0]]
  $region70: #{fc_forward.1} parent=0
    _
  %s15 = ssub.s32 1, %s13
  %s16 = scalar_select 0, %s15, %s13
  $region1: #{fc_forward.1} parent=0
    #allocation2 [shape = 'u8[131072]{0}', space=vmem, size = 0x20000, scoped, tag = 'input window, operand 4, single buffered']
    #allocation3 [shape = 's32[1]{0}', space=sflag, size = 0x4, scoped, tag = 'scoped memory for fc_forward.1']
    #allocation4 [shape = 's32[1]{0}', space=sflag, size = 0x4, scoped, tag = 'scoped memory for fc_forward.1']
    #allocation5 [shape = 'u8[131072]{0}', space=vmem, size = 0x20000, scoped, tag = 'input window, operand 7, single buffered']
    #allocation6 [shape = 's32[1]{0}', space=sflag, size = 0x4, scoped, tag = 'scoped memory for fc_forward.1']
    #allocation7 [shape = 'u8[65536]{0}', space=vmem, size = 0x10000, scoped, tag = 'input window, operand 10, single buffered']
    #allocation8 [shape = 'u8[4096]{0}', space=vmem, size = 0x1000, scoped, tag = 'output window, operand 0, single buffered']
    %17 = vsyncpa [#allocation3], 0
    %18 = vsyncpa [#allocation6], 0
    %19 = vsyncpa [#allocation4], 0
    // Predicated region
    $region2: #{fc_forward.1} parent=1 // pred_check
      _
    $region3: #{fc_forward.1} parent=1 // pred_check_branch
      %21 = sbr.rel (0) target = $region5
    $region4: #{fc_forward.1} parent=1 // pred_region
      _
    $region5: #{fc_forward.1} parent=1 // pred_fallthru
      _
    // Predicated region
    $region6: #{fc_forward.1} parent=1 // pred_check
      _
    $region7: #{fc_forward.1} parent=1 // pred_check_branch
      %23 = sbr.rel (0) target = $region9
    $region8: #{fc_forward.1} parent=1 // pred_region
      _
    $region9: #{fc_forward.1} parent=1 // pred_fallthru
      _
    // Predicated region
    $region10: #{fc_forward.1} parent=1 // pred_check
      _
    $region11: #{fc_forward.1} parent=1 // pred_check_branch
      %25 = sbr.rel (0) target = $region13
    $region12: #{fc_forward.1} parent=1 // pred_region
      _
    $region13: #{fc_forward.1} parent=1 // pred_fallthru
      _
    // Predicated region
    $region14: #{fc_forward.1} parent=1 // pred_check
      _
    $region15: #{fc_forward.1} parent=1 // pred_check_branch
      %27 = sbr.rel (0) target = $region17
    $region16: #{fc_forward.1} parent=1 // pred_region
      _
    $region17: #{fc_forward.1} parent=1 // pred_fallthru
      _
    // Predicated region
    $region18: #{fc_forward.1} parent=1 // pred_check
      _
    $region19: #{fc_forward.1} parent=1 // pred_check_branch
      %29 = sbr.rel (0) target = $region21
    $region20: #{fc_forward.1} parent=1 // pred_region
      %s31 = ssub.s32 4096, 4096
      %32 = vsyncadd [#allocation3], %s31
      %s33 = sshll.u32 [#allocation2], 4
      %s34 = int_to_ptr.vmem [resolvable:$true] %s33
      %39 = dma.hbm_to_vmem [thread:$0]  %s4, 4096, %s34, [#allocation3], 128, 128, 8
    $region21: #{fc_forward.1} parent=1 // pred_fallthru
      _
    // Predicated region
    $region22: #{fc_forward.1} parent=1 // pred_check
      _
    $region23: #{fc_forward.1} parent=1 // pred_check_branch
      %41 = sbr.rel (0) target = $region25
    $region24: #{fc_forward.1} parent=1 // pred_region
      _
    $region25: #{fc_forward.1} parent=1 // pred_fallthru
      _
    // Predicated region
    $region26: #{fc_forward.1} parent=1 // pred_check
      _
    $region27: #{fc_forward.1} parent=1 // pred_check_branch
      %43 = sbr.rel (0) target = $region29
    $region28: #{fc_forward.1} parent=1 // pred_region
      _
    $region29: #{fc_forward.1} parent=1 // pred_fallthru
      _
    // Predicated region
    $region30: #{fc_forward.1} parent=1 // pred_check
      _
    $region31: #{fc_forward.1} parent=1 // pred_check_branch
      %45 = sbr.rel (0) target = $region33
    $region32: #{fc_forward.1} parent=1 // pred_region
      %s47 = ssub.s32 4096, 4096
      %48 = vsyncadd [#allocation6], %s47
      %s49 = sshll.u32 [#allocation5], 4
      %s50 = int_to_ptr.vmem [resolvable:$true] %s49
      %55 = dma.hbm_to_vmem [thread:$0]  %s7, 4096, %s50, [#allocation6], 128, 128, 8
    $region33: #{fc_forward.1} parent=1 // pred_fallthru
      _
    // Predicated region
    $region34: #{fc_forward.1} parent=1 // pred_check
      _
    $region35: #{fc_forward.1} parent=1 // pred_check_branch
      %57 = sbr.rel (0) target = $region37
    $region36: #{fc_forward.1} parent=1 // pred_region
      _
    $region37: #{fc_forward.1} parent=1 // pred_fallthru
      _
    // Predicated region
    $region38: #{fc_forward.1} parent=1 // pred_check
      _
    $region39: #{fc_forward.1} parent=1 // pred_check_branch
      %59 = sbr.rel (0) target = $region41
    $region40: #{fc_forward.1} parent=1 // pred_region
      _
    $region41: #{fc_forward.1} parent=1 // pred_fallthru
      _
    // Predicated region
    $region42: #{fc_forward.1} parent=1 // pred_check
      _
    $region43: #{fc_forward.1} parent=1 // pred_check_branch
      %61 = sbr.rel (0) target = $region45
    $region44: #{fc_forward.1} parent=1 // pred_region
      %s63 = ssub.s32 2048, 2048
      %64 = vsyncadd [#allocation6], %s63
      %s65 = sshll.u32 [#allocation7], 4
      %s66 = int_to_ptr.vmem [resolvable:$true] %s65
      %71 = dma.hbm_to_vmem [thread:$0]  %s10, 2048, %s66, [#allocation6], 64, 64, 4
    $region45: #{fc_forward.1} parent=1 // pred_fallthru
      _
    // Predicated region
    $region46: #{fc_forward.1} parent=1 // pred_check
      _
    $region47: #{fc_forward.1} parent=1 // pred_check_branch
      %73 = sbr.rel (0) target = $region49
    $region48: #{fc_forward.1} parent=1 // pred_region
      _
    $region49: #{fc_forward.1} parent=1 // pred_fallthru
      _
    // Predicated region
    $region50: #{fc_forward.1} parent=1 // pred_check
      _
    $region51: #{fc_forward.1} parent=1 // pred_check_branch
      %75 = sbr.rel (0) target = $region53
    $region52: #{fc_forward.1} parent=1 // pred_region
      %76 = dma.done [#allocation3], 4096
    $region53: #{fc_forward.1} parent=1 // pred_fallthru
      _
    // Predicated region
    $region54: #{fc_forward.1} parent=1 // pred_check
      _
    $region55: #{fc_forward.1} parent=1 // pred_check_branch
      %78 = sbr.rel (0) target = $region57
    $region56: #{fc_forward.1} parent=1 // pred_region
      %79 = dma.done [#allocation6], 4096
    $region57: #{fc_forward.1} parent=1 // pred_fallthru
      _
    // Predicated region
    $region58: #{fc_forward.1} parent=1 // pred_check
      _
    $region59: #{fc_forward.1} parent=1 // pred_check_branch
      %81 = sbr.rel (0) target = $region61
    $region60: #{fc_forward.1} parent=1 // pred_region
      %82 = dma.done [#allocation6], 2048
    $region61: #{fc_forward.1} parent=1 // pred_fallthru
      _
    %v84 = vld [vmem:[%s0] sm:$0xff]
    %v85 = vld [vmem:[%s0 + $0x8] sm:$0xff]
    %v86 = vld [vmem:[%s0 + $0x10] sm:$0xff]
    %v87 = vld [vmem:[%s0 + $0x18] sm:$0xff]
    %v88 = vld [vmem:[%s1] sm:$0xff]
    %v89 = vld [vmem:[%s1 + $0x8] sm:$0xff]
    %v90 = vld [vmem:[%s1 + $0x10] sm:$0xff]
    %v91 = vld [vmem:[%s1 + $0x18] sm:$0xff]
    %v92 = vld [vmem:[%s1 + $0x20] sm:$0xff]
    %v93 = vld [vmem:[%s1 + $0x28] sm:$0xff]
    %v94 = vld [vmem:[%s1 + $0x30] sm:$0xff]
    %v95 = vld [vmem:[%s1 + $0x38] sm:$0xff]
    %v96 = vld [vmem:[%s1 + $0x40] sm:$0xff]
    %v97 = vld [vmem:[%s1 + $0x48] sm:$0xff]
    %v98 = vld [vmem:[%s1 + $0x50] sm:$0xff]
    %v99 = vld [vmem:[%s1 + $0x58] sm:$0xff]
    %v100 = vld [vmem:[%s1 + $0x60] sm:$0xff]
    %v101 = vld [vmem:[%s1 + $0x68] sm:$0xff]
    %v102 = vld [vmem:[%s1 + $0x70] sm:$0xff]
    %v103 = vld [vmem:[%s1 + $0x78] sm:$0xff]
    %v104 = vld [vmem:[%s1 + $0x80] sm:$0xff]
    %v105 = vld [vmem:[%s1 + $0x88] sm:$0xff]
    %v106 = vld [vmem:[%s1 + $0x90] sm:$0xff]
    %v107 = vld [vmem:[%s1 + $0x98] sm:$0xff]
    %v108 = vld [vmem:[%s1 + $0xa0] sm:$0xff]
    %v109 = vld [vmem:[%s1 + $0xa8] sm:$0xff]
    %v110 = vld [vmem:[%s1 + $0xb0] sm:$0xff]
    %v111 = vld [vmem:[%s1 + $0xb8] sm:$0xff]
    %v112 = vld [vmem:[%s1 + $0xc0] sm:$0xff]
    %v113 = vld [vmem:[%s1 + $0xc8] sm:$0xff]
    %v114 = vld [vmem:[%s1 + $0xd0] sm:$0xff]
    %v115 = vld [vmem:[%s1 + $0xd8] sm:$0xff]
    %v116 = vld [vmem:[%s1 + $0xe0] sm:$0xff]
    %v117 = vld [vmem:[%s1 + $0xe8] sm:$0xff]
    %v118 = vld [vmem:[%s1 + $0xf0] sm:$0xff]
    %v119 = vld [vmem:[%s1 + $0xf8] sm:$0xff]
    %v120 = vld [vmem:[%s1 + $0x100] sm:$0xff]
    %v121 = vld [vmem:[%s1 + $0x108] sm:$0xff]
    %v122 = vld [vmem:[%s1 + $0x110] sm:$0xff]
    %v123 = vld [vmem:[%s1 + $0x118] sm:$0xff]
    %v124 = vld [vmem:[%s1 + $0x120] sm:$0xff]
    %v125 = vld [vmem:[%s1 + $0x128] sm:$0xff]
    %v126 = vld [vmem:[%s1 + $0x130] sm:$0xff]
    %v127 = vld [vmem:[%s1 + $0x138] sm:$0xff]
    %v128 = vld [vmem:[%s1 + $0x140] sm:$0xff]
    %v129 = vld [vmem:[%s1 + $0x148] sm:$0xff]
    %v130 = vld [vmem:[%s1 + $0x150] sm:$0xff]
    %v131 = vld [vmem:[%s1 + $0x158] sm:$0xff]
    %v132 = vld [vmem:[%s1 + $0x160] sm:$0xff]
    %v133 = vld [vmem:[%s1 + $0x168] sm:$0xff]
    %v134 = vld [vmem:[%s1 + $0x170] sm:$0xff]
    %v135 = vld [vmem:[%s1 + $0x178] sm:$0xff]
    %v136 = vld [vmem:[%s1 + $0x180] sm:$0xff]
    %v137 = vld [vmem:[%s1 + $0x188] sm:$0xff]
    %v138 = vld [vmem:[%s1 + $0x190] sm:$0xff]
    %v139 = vld [vmem:[%s1 + $0x198] sm:$0xff]
    %v140 = vld [vmem:[%s1 + $0x1a0] sm:$0xff]
    %v141 = vld [vmem:[%s1 + $0x1a8] sm:$0xff]
    %v142 = vld [vmem:[%s1 + $0x1b0] sm:$0xff]
    %v143 = vld [vmem:[%s1 + $0x1b8] sm:$0xff]
    %v144 = vld [vmem:[%s1 + $0x1c0] sm:$0xff]
    %v145 = vld [vmem:[%s1 + $0x1c8] sm:$0xff]
    %v146 = vld [vmem:[%s1 + $0x1d0] sm:$0xff]
    %v147 = vld [vmem:[%s1 + $0x1d8] sm:$0xff]
    %v148 = vld [vmem:[%s1 + $0x1e0] sm:$0xff]
    %v149 = vld [vmem:[%s1 + $0x1e8] sm:$0xff]
    %v150 = vld [vmem:[%s1 + $0x1f0] sm:$0xff]
    %v151 = vld [vmem:[%s1 + $0x1f8] sm:$0xff]
    %v152 = vld [vmem:[%s1 + $0x200] sm:$0xff]
    %v153 = vld [vmem:[%s1 + $0x208] sm:$0xff]
    %v154 = vld [vmem:[%s1 + $0x210] sm:$0xff]
    %v155 = vld [vmem:[%s1 + $0x218] sm:$0xff]
    %v156 = vld [vmem:[%s1 + $0x220] sm:$0xff]
    %v157 = vld [vmem:[%s1 + $0x228] sm:$0xff]
    %v158 = vld [vmem:[%s1 + $0x230] sm:$0xff]
    %v159 = vld [vmem:[%s1 + $0x238] sm:$0xff]
    %v160 = vld [vmem:[%s1 + $0x240] sm:$0xff]
    %v161 = vld [vmem:[%s1 + $0x248] sm:$0xff]
    %v162 = vld [vmem:[%s1 + $0x250] sm:$0xff]
    %v163 = vld [vmem:[%s1 + $0x258] sm:$0xff]
    %v164 = vld [vmem:[%s1 + $0x260] sm:$0xff]
    %v165 = vld [vmem:[%s1 + $0x268] sm:$0xff]
    %v166 = vld [vmem:[%s1 + $0x270] sm:$0xff]
    %v167 = vld [vmem:[%s1 + $0x278] sm:$0xff]
    %v168 = vld [vmem:[%s1 + $0x280] sm:$0xff]
    %v169 = vld [vmem:[%s1 + $0x288] sm:$0xff]
    %v170 = vld [vmem:[%s1 + $0x290] sm:$0xff]
    %v171 = vld [vmem:[%s1 + $0x298] sm:$0xff]
    %v172 = vld [vmem:[%s1 + $0x2a0] sm:$0xff]
    %v173 = vld [vmem:[%s1 + $0x2a8] sm:$0xff]
    %v174 = vld [vmem:[%s1 + $0x2b0] sm:$0xff]
    %v175 = vld [vmem:[%s1 + $0x2b8] sm:$0xff]
    %v176 = vld [vmem:[%s1 + $0x2c0] sm:$0xff]
    %v177 = vld [vmem:[%s1 + $0x2c8] sm:$0xff]
    %v178 = vld [vmem:[%s1 + $0x2d0] sm:$0xff]
    %v179 = vld [vmem:[%s1 + $0x2d8] sm:$0xff]
    %v180 = vld [vmem:[%s1 + $0x2e0] sm:$0xff]
    %v181 = vld [vmem:[%s1 + $0x2e8] sm:$0xff]
    %v182 = vld [vmem:[%s1 + $0x2f0] sm:$0xff]
    %v183 = vld [vmem:[%s1 + $0x2f8] sm:$0xff]
    %v184 = vld [vmem:[%s1 + $0x300] sm:$0xff]
    %v185 = vld [vmem:[%s1 + $0x308] sm:$0xff]
    %v186 = vld [vmem:[%s1 + $0x310] sm:$0xff]
    %v187 = vld [vmem:[%s1 + $0x318] sm:$0xff]
    %v188 = vld [vmem:[%s1 + $0x320] sm:$0xff]
    %v189 = vld [vmem:[%s1 + $0x328] sm:$0xff]
    %v190 = vld [vmem:[%s1 + $0x330] sm:$0xff]
    %v191 = vld [vmem:[%s1 + $0x338] sm:$0xff]
    %v192 = vld [vmem:[%s1 + $0x340] sm:$0xff]
    %v193 = vld [vmem:[%s1 + $0x348] sm:$0xff]
    %v194 = vld [vmem:[%s1 + $0x350] sm:$0xff]
    %v195 = vld [vmem:[%s1 + $0x358] sm:$0xff]
    %v196 = vld [vmem:[%s1 + $0x360] sm:$0xff]
    %v197 = vld [vmem:[%s1 + $0x368] sm:$0xff]
    %v198 = vld [vmem:[%s1 + $0x370] sm:$0xff]
    %v199 = vld [vmem:[%s1 + $0x378] sm:$0xff]
    %v200 = vld [vmem:[%s1 + $0x380] sm:$0xff]
    %v201 = vld [vmem:[%s1 + $0x388] sm:$0xff]
    %v202 = vld [vmem:[%s1 + $0x390] sm:$0xff]
    %v203 = vld [vmem:[%s1 + $0x398] sm:$0xff]
    %v204 = vld [vmem:[%s1 + $0x3a0] sm:$0xff]
    %v205 = vld [vmem:[%s1 + $0x3a8] sm:$0xff]
    %v206 = vld [vmem:[%s1 + $0x3b0] sm:$0xff]
    %v207 = vld [vmem:[%s1 + $0x3b8] sm:$0xff]
    %v208 = vld [vmem:[%s1 + $0x3c0] sm:$0xff]
    %v209 = vld [vmem:[%s1 + $0x3c8] sm:$0xff]
    %v210 = vld [vmem:[%s1 + $0x3d0] sm:$0xff]
    %v211 = vld [vmem:[%s1 + $0x3d8] sm:$0xff]
    %v212 = vld [vmem:[%s1 + $0x3e0] sm:$0xff]
    %v213 = vld [vmem:[%s1 + $0x3e8] sm:$0xff]
    %v214 = vld [vmem:[%s1 + $0x3f0] sm:$0xff]
    %v215 = vld [vmem:[%s1 + $0x3f8] sm:$0xff]
    %v220 = vunpack.c.l.b16 %v84
    %v221 = vunpack.c.h.b16 %v84
    %v222 = vunpack.c.l.b16 %v85
    %v223 = vunpack.c.h.b16 %v85
    %v224 = vunpack.c.l.b16 %v86
    %v225 = vunpack.c.h.b16 %v86
    %v226 = vunpack.c.l.b16 %v87
    %v227 = vunpack.c.h.b16 %v87
    %v228 = vpack.c.b16 %v220, %v220
    %v229 = vpack.c.b16 %v221, %v221
    %v230 = vpack.c.b16 %v222, %v222
    %v231 = vpack.c.b16 %v223, %v223
    %v232 = vpack.c.b16 %v224, %v224
    %v233 = vpack.c.b16 %v225, %v225
    %v234 = vpack.c.b16 %v226, %v226
    %v235 = vpack.c.b16 %v227, %v227
    %v372 = vunpack.c.l.b16 %v88
    %v373 = vunpack.c.h.b16 %v88
    %v374 = vunpack.c.l.b16 %v89
    %v375 = vunpack.c.h.b16 %v89
    %v376 = vunpack.c.l.b16 %v90
    %v377 = vunpack.c.h.b16 %v90
    %v378 = vunpack.c.l.b16 %v91
    %v379 = vunpack.c.h.b16 %v91
    %v380 = vunpack.c.l.b16 %v92
    %v381 = vunpack.c.h.b16 %v92
    %v382 = vunpack.c.l.b16 %v93
    %v383 = vunpack.c.h.b16 %v93
    %v384 = vunpack.c.l.b16 %v94
    %v385 = vunpack.c.h.b16 %v94
    %v386 = vunpack.c.l.b16 %v95
    %v387 = vunpack.c.h.b16 %v95
    %v388 = vunpack.c.l.b16 %v96
    %v389 = vunpack.c.h.b16 %v96
    %v390 = vunpack.c.l.b16 %v97
    %v391 = vunpack.c.h.b16 %v97
    %v392 = vunpack.c.l.b16 %v98
    %v393 = vunpack.c.h.b16 %v98
    %v394 = vunpack.c.l.b16 %v99
    %v395 = vunpack.c.h.b16 %v99
    %v396 = vunpack.c.l.b16 %v100
    %v397 = vunpack.c.h.b16 %v100
    %v398 = vunpack.c.l.b16 %v101
    %v399 = vunpack.c.h.b16 %v101
    %v400 = vunpack.c.l.b16 %v102
    %v401 = vunpack.c.h.b16 %v102
    %v402 = vunpack.c.l.b16 %v103
    %v403 = vunpack.c.h.b16 %v103
    %v404 = vunpack.c.l.b16 %v104
    %v405 = vunpack.c.h.b16 %v104
    %v406 = vunpack.c.l.b16 %v105
    %v407 = vunpack.c.h.b16 %v105
    %v408 = vunpack.c.l.b16 %v106
    %v409 = vunpack.c.h.b16 %v106
    %v410 = vunpack.c.l.b16 %v107
    %v411 = vunpack.c.h.b16 %v107
    %v412 = vunpack.c.l.b16 %v108
    %v413 = vunpack.c.h.b16 %v108
    %v414 = vunpack.c.l.b16 %v109
    %v415 = vunpack.c.h.b16 %v109
    %v416 = vunpack.c.l.b16 %v110
    %v417 = vunpack.c.h.b16 %v110
    %v418 = vunpack.c.l.b16 %v111
    %v419 = vunpack.c.h.b16 %v111
    %v420 = vunpack.c.l.b16 %v112
    %v421 = vunpack.c.h.b16 %v112
    %v422 = vunpack.c.l.b16 %v113
    %v423 = vunpack.c.h.b16 %v113
    %v424 = vunpack.c.l.b16 %v114
    %v425 = vunpack.c.h.b16 %v114
    %v426 = vunpack.c.l.b16 %v115
    %v427 = vunpack.c.h.b16 %v115
    %v428 = vunpack.c.l.b16 %v116
    %v429 = vunpack.c.h.b16 %v116
    %v430 = vunpack.c.l.b16 %v117
    %v431 = vunpack.c.h.b16 %v117
    %v432 = vunpack.c.l.b16 %v118
    %v433 = vunpack.c.h.b16 %v118
    %v434 = vunpack.c.l.b16 %v119
    %v435 = vunpack.c.h.b16 %v119
    %v436 = vunpack.c.l.b16 %v120
    %v437 = vunpack.c.h.b16 %v120
    %v438 = vunpack.c.l.b16 %v121
    %v439 = vunpack.c.h.b16 %v121
    %v440 = vunpack.c.l.b16 %v122
    %v441 = vunpack.c.h.b16 %v122
    %v442 = vunpack.c.l.b16 %v123
    %v443 = vunpack.c.h.b16 %v123
    %v444 = vunpack.c.l.b16 %v124
    %v445 = vunpack.c.h.b16 %v124
    %v446 = vunpack.c.l.b16 %v125
    %v447 = vunpack.c.h.b16 %v125
    %v448 = vunpack.c.l.b16 %v126
    %v449 = vunpack.c.h.b16 %v126
    %v450 = vunpack.c.l.b16 %v127
    %v451 = vunpack.c.h.b16 %v127
    %v452 = vunpack.c.l.b16 %v128
    %v453 = vunpack.c.h.b16 %v128
    %v454 = vunpack.c.l.b16 %v129
    %v455 = vunpack.c.h.b16 %v129
    %v456 = vunpack.c.l.b16 %v130
    %v457 = vunpack.c.h.b16 %v130
    %v458 = vunpack.c.l.b16 %v131
    %v459 = vunpack.c.h.b16 %v131
    %v460 = vunpack.c.l.b16 %v132
    %v461 = vunpack.c.h.b16 %v132
    %v462 = vunpack.c.l.b16 %v133
    %v463 = vunpack.c.h.b16 %v133
    %v464 = vunpack.c.l.b16 %v134
    %v465 = vunpack.c.h.b16 %v134
    %v466 = vunpack.c.l.b16 %v135
    %v467 = vunpack.c.h.b16 %v135
    %v468 = vunpack.c.l.b16 %v136
    %v469 = vunpack.c.h.b16 %v136
    %v470 = vunpack.c.l.b16 %v137
    %v471 = vunpack.c.h.b16 %v137
    %v472 = vunpack.c.l.b16 %v138
    %v473 = vunpack.c.h.b16 %v138
    %v474 = vunpack.c.l.b16 %v139
    %v475 = vunpack.c.h.b16 %v139
    %v476 = vunpack.c.l.b16 %v140
    %v477 = vunpack.c.h.b16 %v140
    %v478 = vunpack.c.l.b16 %v141
    %v479 = vunpack.c.h.b16 %v141
    %v480 = vunpack.c.l.b16 %v142
    %v481 = vunpack.c.h.b16 %v142
    %v482 = vunpack.c.l.b16 %v143
    %v483 = vunpack.c.h.b16 %v143
    %v484 = vunpack.c.l.b16 %v144
    %v485 = vunpack.c.h.b16 %v144
    %v486 = vunpack.c.l.b16 %v145
    %v487 = vunpack.c.h.b16 %v145
    %v488 = vunpack.c.l.b16 %v146
    %v489 = vunpack.c.h.b16 %v146
    %v490 = vunpack.c.l.b16 %v147
    %v491 = vunpack.c.h.b16 %v147
    %v492 = vunpack.c.l.b16 %v148
    %v493 = vunpack.c.h.b16 %v148
    %v494 = vunpack.c.l.b16 %v149
    %v495 = vunpack.c.h.b16 %v149
    %v496 = vunpack.c.l.b16 %v150
    %v497 = vunpack.c.h.b16 %v150
    %v498 = vunpack.c.l.b16 %v151
    %v499 = vunpack.c.h.b16 %v151
    %v500 = vunpack.c.l.b16 %v152
    %v501 = vunpack.c.h.b16 %v152
    %v502 = vunpack.c.l.b16 %v153
    %v503 = vunpack.c.h.b16 %v153
    %v504 = vunpack.c.l.b16 %v154
    %v505 = vunpack.c.h.b16 %v154
    %v506 = vunpack.c.l.b16 %v155
    %v507 = vunpack.c.h.b16 %v155
    %v508 = vunpack.c.l.b16 %v156
    %v509 = vunpack.c.h.b16 %v156
    %v510 = vunpack.c.l.b16 %v157
    %v511 = vunpack.c.h.b16 %v157
    %v512 = vunpack.c.l.b16 %v158
    %v513 = vunpack.c.h.b16 %v158
    %v514 = vunpack.c.l.b16 %v159
    %v515 = vunpack.c.h.b16 %v159
    %v516 = vunpack.c.l.b16 %v160
    %v517 = vunpack.c.h.b16 %v160
    %v518 = vunpack.c.l.b16 %v161
    %v519 = vunpack.c.h.b16 %v161
    %v520 = vunpack.c.l.b16 %v162
    %v521 = vunpack.c.h.b16 %v162
    %v522 = vunpack.c.l.b16 %v163
    %v523 = vunpack.c.h.b16 %v163
    %v524 = vunpack.c.l.b16 %v164
    %v525 = vunpack.c.h.b16 %v164
    %v526 = vunpack.c.l.b16 %v165
    %v527 = vunpack.c.h.b16 %v165
    %v528 = vunpack.c.l.b16 %v166
    %v529 = vunpack.c.h.b16 %v166
    %v530 = vunpack.c.l.b16 %v167
    %v531 = vunpack.c.h.b16 %v167
    %v532 = vunpack.c.l.b16 %v168
    %v533 = vunpack.c.h.b16 %v168
    %v534 = vunpack.c.l.b16 %v169
    %v535 = vunpack.c.h.b16 %v169
    %v536 = vunpack.c.l.b16 %v170
    %v537 = vunpack.c.h.b16 %v170
    %v538 = vunpack.c.l.b16 %v171
    %v539 = vunpack.c.h.b16 %v171
    %v540 = vunpack.c.l.b16 %v172
    %v541 = vunpack.c.h.b16 %v172
    %v542 = vunpack.c.l.b16 %v173
    %v543 = vunpack.c.h.b16 %v173
    %v544 = vunpack.c.l.b16 %v174
    %v545 = vunpack.c.h.b16 %v174
    %v546 = vunpack.c.l.b16 %v175
    %v547 = vunpack.c.h.b16 %v175
    %v548 = vunpack.c.l.b16 %v176
    %v549 = vunpack.c.h.b16 %v176
    %v550 = vunpack.c.l.b16 %v177
    %v551 = vunpack.c.h.b16 %v177
    %v552 = vunpack.c.l.b16 %v178
    %v553 = vunpack.c.h.b16 %v178
    %v554 = vunpack.c.l.b16 %v179
    %v555 = vunpack.c.h.b16 %v179
    %v556 = vunpack.c.l.b16 %v180
    %v557 = vunpack.c.h.b16 %v180
    %v558 = vunpack.c.l.b16 %v181
    %v559 = vunpack.c.h.b16 %v181
    %v560 = vunpack.c.l.b16 %v182
    %v561 = vunpack.c.h.b16 %v182
    %v562 = vunpack.c.l.b16 %v183
    %v563 = vunpack.c.h.b16 %v183
    %v564 = vunpack.c.l.b16 %v184
    %v565 = vunpack.c.h.b16 %v184
    %v566 = vunpack.c.l.b16 %v185
    %v567 = vunpack.c.h.b16 %v185
    %v568 = vunpack.c.l.b16 %v186
    %v569 = vunpack.c.h.b16 %v186
    %v570 = vunpack.c.l.b16 %v187
    %v571 = vunpack.c.h.b16 %v187
    %v572 = vunpack.c.l.b16 %v188
    %v573 = vunpack.c.h.b16 %v188
    %v574 = vunpack.c.l.b16 %v189
    %v575 = vunpack.c.h.b16 %v189
    %v576 = vunpack.c.l.b16 %v190
    %v577 = vunpack.c.h.b16 %v190
    %v578 = vunpack.c.l.b16 %v191
    %v579 = vunpack.c.h.b16 %v191
    %v580 = vunpack.c.l.b16 %v192
    %v581 = vunpack.c.h.b16 %v192
    %v582 = vunpack.c.l.b16 %v193
    %v583 = vunpack.c.h.b16 %v193
    %v584 = vunpack.c.l.b16 %v194
    %v585 = vunpack.c.h.b16 %v194
    %v586 = vunpack.c.l.b16 %v195
    %v587 = vunpack.c.h.b16 %v195
    %v588 = vunpack.c.l.b16 %v196
    %v589 = vunpack.c.h.b16 %v196
    %v590 = vunpack.c.l.b16 %v197
    %v591 = vunpack.c.h.b16 %v197
    %v592 = vunpack.c.l.b16 %v198
    %v593 = vunpack.c.h.b16 %v198
    %v594 = vunpack.c.l.b16 %v199
    %v595 = vunpack.c.h.b16 %v199
    %v596 = vunpack.c.l.b16 %v200
    %v597 = vunpack.c.h.b16 %v200
    %v598 = vunpack.c.l.b16 %v201
    %v599 = vunpack.c.h.b16 %v201
    %v600 = vunpack.c.l.b16 %v202
    %v601 = vunpack.c.h.b16 %v202
    %v602 = vunpack.c.l.b16 %v203
    %v603 = vunpack.c.h.b16 %v203
    %v604 = vunpack.c.l.b16 %v204
    %v605 = vunpack.c.h.b16 %v204
    %v606 = vunpack.c.l.b16 %v205
    %v607 = vunpack.c.h.b16 %v205
    %v608 = vunpack.c.l.b16 %v206
    %v609 = vunpack.c.h.b16 %v206
    %v610 = vunpack.c.l.b16 %v207
    %v611 = vunpack.c.h.b16 %v207
    %v612 = vunpack.c.l.b16 %v208
    %v613 = vunpack.c.h.b16 %v208
    %v614 = vunpack.c.l.b16 %v209
    %v615 = vunpack.c.h.b16 %v209
    %v616 = vunpack.c.l.b16 %v210
    %v617 = vunpack.c.h.b16 %v210
    %v618 = vunpack.c.l.b16 %v211
    %v619 = vunpack.c.h.b16 %v211
    %v620 = vunpack.c.l.b16 %v212
    %v621 = vunpack.c.h.b16 %v212
    %v622 = vunpack.c.l.b16 %v213
    %v623 = vunpack.c.h.b16 %v213
    %v624 = vunpack.c.l.b16 %v214
    %v625 = vunpack.c.h.b16 %v214
    %v626 = vunpack.c.l.b16 %v215
    %v627 = vunpack.c.h.b16 %v215
    %v628 = vpack.c.b16 %v374, %v372
    %v629 = vpack.c.b16 %v375, %v373
    %v630 = vpack.c.b16 %v378, %v376
    %v631 = vpack.c.b16 %v379, %v377
    %v632 = vpack.c.b16 %v382, %v380
    %v633 = vpack.c.b16 %v383, %v381
    %v634 = vpack.c.b16 %v386, %v384
    %v635 = vpack.c.b16 %v387, %v385
    %v636 = vpack.c.b16 %v390, %v388
    %v637 = vpack.c.b16 %v391, %v389
    %v638 = vpack.c.b16 %v394, %v392
    %v639 = vpack.c.b16 %v395, %v393
    %v640 = vpack.c.b16 %v398, %v396
    %v641 = vpack.c.b16 %v399, %v397
    %v642 = vpack.c.b16 %v402, %v400
    %v643 = vpack.c.b16 %v403, %v401
    %v644 = vpack.c.b16 %v406, %v404
    %v645 = vpack.c.b16 %v407, %v405
    %v646 = vpack.c.b16 %v410, %v408
    %v647 = vpack.c.b16 %v411, %v409
    %v648 = vpack.c.b16 %v414, %v412
    %v649 = vpack.c.b16 %v415, %v413
    %v650 = vpack.c.b16 %v418, %v416
    %v651 = vpack.c.b16 %v419, %v417
    %v652 = vpack.c.b16 %v422, %v420
    %v653 = vpack.c.b16 %v423, %v421
    %v654 = vpack.c.b16 %v426, %v424
    %v655 = vpack.c.b16 %v427, %v425
    %v656 = vpack.c.b16 %v430, %v428
    %v657 = vpack.c.b16 %v431, %v429
    %v658 = vpack.c.b16 %v434, %v432
    %v659 = vpack.c.b16 %v435, %v433
    %v660 = vpack.c.b16 %v438, %v436
    %v661 = vpack.c.b16 %v439, %v437
    %v662 = vpack.c.b16 %v442, %v440
    %v663 = vpack.c.b16 %v443, %v441
    %v664 = vpack.c.b16 %v446, %v444
    %v665 = vpack.c.b16 %v447, %v445
    %v666 = vpack.c.b16 %v450, %v448
    %v667 = vpack.c.b16 %v451, %v449
    %v668 = vpack.c.b16 %v454, %v452
    %v669 = vpack.c.b16 %v455, %v453
    %v670 = vpack.c.b16 %v458, %v456
    %v671 = vpack.c.b16 %v459, %v457
    %v672 = vpack.c.b16 %v462, %v460
    %v673 = vpack.c.b16 %v463, %v461
    %v674 = vpack.c.b16 %v466, %v464
    %v675 = vpack.c.b16 %v467, %v465
    %v676 = vpack.c.b16 %v470, %v468
    %v677 = vpack.c.b16 %v471, %v469
    %v678 = vpack.c.b16 %v474, %v472
    %v679 = vpack.c.b16 %v475, %v473
    %v680 = vpack.c.b16 %v478, %v476
    %v681 = vpack.c.b16 %v479, %v477
    %v682 = vpack.c.b16 %v482, %v480
    %v683 = vpack.c.b16 %v483, %v481
    %v684 = vpack.c.b16 %v486, %v484
    %v685 = vpack.c.b16 %v487, %v485
    %v686 = vpack.c.b16 %v490, %v488
    %v687 = vpack.c.b16 %v491, %v489
    %v688 = vpack.c.b16 %v494, %v492
    %v689 = vpack.c.b16 %v495, %v493
    %v690 = vpack.c.b16 %v498, %v496
    %v691 = vpack.c.b16 %v499, %v497
    %v692 = vpack.c.b16 %v502, %v500
    %v693 = vpack.c.b16 %v503, %v501
    %v694 = vpack.c.b16 %v506, %v504
    %v695 = vpack.c.b16 %v507, %v505
    %v696 = vpack.c.b16 %v510, %v508
    %v697 = vpack.c.b16 %v511, %v509
    %v698 = vpack.c.b16 %v514, %v512
    %v699 = vpack.c.b16 %v515, %v513
    %v700 = vpack.c.b16 %v518, %v516
    %v701 = vpack.c.b16 %v519, %v517
    %v702 = vpack.c.b16 %v522, %v520
    %v703 = vpack.c.b16 %v523, %v521
    %v704 = vpack.c.b16 %v526, %v524
    %v705 = vpack.c.b16 %v527, %v525
    %v706 = vpack.c.b16 %v530, %v528
    %v707 = vpack.c.b16 %v531, %v529
    %v708 = vpack.c.b16 %v534, %v532
    %v709 = vpack.c.b16 %v535, %v533
    %v710 = vpack.c.b16 %v538, %v536
    %v711 = vpack.c.b16 %v539, %v537
    %v712 = vpack.c.b16 %v542, %v540
    %v713 = vpack.c.b16 %v543, %v541
    %v714 = vpack.c.b16 %v546, %v544
    %v715 = vpack.c.b16 %v547, %v545
    %v716 = vpack.c.b16 %v550, %v548
    %v717 = vpack.c.b16 %v551, %v549
    %v718 = vpack.c.b16 %v554, %v552
    %v719 = vpack.c.b16 %v555, %v553
    %v720 = vpack.c.b16 %v558, %v556
    %v721 = vpack.c.b16 %v559, %v557
    %v722 = vpack.c.b16 %v562, %v560
    %v723 = vpack.c.b16 %v563, %v561
    %v724 = vpack.c.b16 %v566, %v564
    %v725 = vpack.c.b16 %v567, %v565
    %v726 = vpack.c.b16 %v570, %v568
    %v727 = vpack.c.b16 %v571, %v569
    %v728 = vpack.c.b16 %v574, %v572
    %v729 = vpack.c.b16 %v575, %v573
    %v730 = vpack.c.b16 %v578, %v576
    %v731 = vpack.c.b16 %v579, %v577
    %v732 = vpack.c.b16 %v582, %v580
    %v733 = vpack.c.b16 %v583, %v581
    %v734 = vpack.c.b16 %v586, %v584
    %v735 = vpack.c.b16 %v587, %v585
    %v736 = vpack.c.b16 %v590, %v588
    %v737 = vpack.c.b16 %v591, %v589
    %v738 = vpack.c.b16 %v594, %v592
    %v739 = vpack.c.b16 %v595, %v593
    %v740 = vpack.c.b16 %v598, %v596
    %v741 = vpack.c.b16 %v599, %v597
    %v742 = vpack.c.b16 %v602, %v600
    %v743 = vpack.c.b16 %v603, %v601
    %v744 = vpack.c.b16 %v606, %v604
    %v745 = vpack.c.b16 %v607, %v605
    %v746 = vpack.c.b16 %v610, %v608
    %v747 = vpack.c.b16 %v611, %v609
    %v748 = vpack.c.b16 %v614, %v612
    %v749 = vpack.c.b16 %v615, %v613
    %v750 = vpack.c.b16 %v618, %v616
    %v751 = vpack.c.b16 %v619, %v617
    %v752 = vpack.c.b16 %v622, %v620
    %v753 = vpack.c.b16 %v623, %v621
    %v754 = vpack.c.b16 %v626, %v624
    %v755 = vpack.c.b16 %v627, %v625
    %884 = vmatprep.subr.bf16.mxu0 %v643
    %885 = vmatpush1.bf16.msra.mxu0 %v642
    %886 = vmatprep.subr.bf16.mxu0 %v641
    %887 = vmatpush1.bf16.msra.mxu0 %v640
    %888 = vmatprep.subr.bf16.mxu0 %v639
    %889 = vmatpush1.bf16.msra.mxu0 %v638
    %890 = vmatprep.subr.bf16.mxu0 %v637
    %891 = vmatpush1.bf16.msra.mxu0 %v636
    %892 = vmatprep.subr.bf16.mxu0 %v635
    %893 = vmatpush1.bf16.msra.mxu0 %v634
    %894 = vmatprep.subr.bf16.mxu0 %v633
    %895 = vmatpush1.bf16.msra.mxu0 %v632
    %896 = vmatprep.subr.bf16.mxu0 %v631
    %897 = vmatpush1.bf16.msra.mxu0 %v630
    %898 = vmatprep.subr.bf16.mxu0 %v629
    %899 = vmatpush1.bf16.msra.mxu0 %v628
    %900 = vmatprep.subr.bf16.mxu0 %v659
    %901 = vmatpush2.bf16.msra.mxu0 %v658
    %902 = vmatprep.subr.bf16.mxu0 %v657
    %903 = vmatpush2.bf16.msra.mxu0 %v656
    %904 = vmatprep.subr.bf16.mxu0 %v655
    %905 = vmatpush2.bf16.msra.mxu0 %v654
    %906 = vmatprep.subr.bf16.mxu0 %v653
    %907 = vmatpush2.bf16.msra.mxu0 %v652
    %908 = vmatprep.subr.bf16.mxu0 %v651
    %909 = vmatpush2.bf16.msra.mxu0 %v650
    %910 = vmatprep.subr.bf16.mxu0 %v649
    %911 = vmatpush2.bf16.msra.mxu0 %v648
    %912 = vmatprep.subr.bf16.mxu0 %v647
    %913 = vmatpush2.bf16.msra.mxu0 %v646
    %914 = vmatprep.subr.bf16.mxu0 %v645
    %915 = vmatpush2.bf16.msra.mxu0 %v644
    %916 = vmatprep.mubr.bf16.mxu0 %v229
    %917 = vmatmul.mubr.bf16.gmra.mxu0 %v228
    %v918 = vpop.f32.mrf.mxu0
    %v919 = vadd.f32 0.0, %v918
    %v920 = vpop.f32.mrf.mxu0
    %v921 = vadd.f32 0.0, %v920
    %v922 = vpop.f32.mrf.mxu0
    %v923 = vpop.f32.mrf.mxu0
    %924 = vdwg.mxu0
    %925 = vmatprep.subr.bf16.mxu0 %v675
    %926 = vmatpush1.bf16.msra.mxu0 %v674
    %927 = vmatprep.subr.bf16.mxu0 %v673
    %928 = vmatpush1.bf16.msra.mxu0 %v672
    %929 = vmatprep.subr.bf16.mxu0 %v671
    %930 = vmatpush1.bf16.msra.mxu0 %v670
    %931 = vmatprep.subr.bf16.mxu0 %v669
    %932 = vmatpush1.bf16.msra.mxu0 %v668
    %933 = vmatprep.subr.bf16.mxu0 %v667
    %934 = vmatpush1.bf16.msra.mxu0 %v666
    %935 = vmatprep.subr.bf16.mxu0 %v665
    %936 = vmatpush1.bf16.msra.mxu0 %v664
    %937 = vmatprep.subr.bf16.mxu0 %v663
    %938 = vmatpush1.bf16.msra.mxu0 %v662
    %939 = vmatprep.subr.bf16.mxu0 %v661
    %940 = vmatpush1.bf16.msra.mxu0 %v660
    %941 = vmatprep.subr.bf16.mxu0 %v691
    %942 = vmatpush2.bf16.msra.mxu0 %v690
    %943 = vmatprep.subr.bf16.mxu0 %v689
    %944 = vmatpush2.bf16.msra.mxu0 %v688
    %945 = vmatprep.subr.bf16.mxu0 %v687
    %946 = vmatpush2.bf16.msra.mxu0 %v686
    %947 = vmatprep.subr.bf16.mxu0 %v685
    %948 = vmatpush2.bf16.msra.mxu0 %v684
    %949 = vmatprep.subr.bf16.mxu0 %v683
    %950 = vmatpush2.bf16.msra.mxu0 %v682
    %951 = vmatprep.subr.bf16.mxu0 %v681
    %952 = vmatpush2.bf16.msra.mxu0 %v680
    %953 = vmatprep.subr.bf16.mxu0 %v679
    %954 = vmatpush2.bf16.msra.mxu0 %v678
    %955 = vmatprep.subr.bf16.mxu0 %v677
    %956 = vmatpush2.bf16.msra.mxu0 %v676
    %957 = vmatprep.mubr.bf16.mxu0 %v231
    %958 = vmatmul.mubr.bf16.gmra.mxu0 %v230
    %v959 = vpop.f32.mrf.mxu0
    %v960 = vadd.f32 %v919, %v959
    %v961 = vpop.f32.mrf.mxu0
    %v962 = vadd.f32 %v921, %v961
    %v963 = vpop.f32.mrf.mxu0
    %v964 = vpop.f32.mrf.mxu0
    %965 = vdwg.mxu0
    %966 = vmatprep.subr.bf16.mxu0 %v707
    %967 = vmatpush1.bf16.msra.mxu0 %v706
    %968 = vmatprep.subr.bf16.mxu0 %v705
    %969 = vmatpush1.bf16.msra.mxu0 %v704
    %970 = vmatprep.subr.bf16.mxu0 %v703
    %971 = vmatpush1.bf16.msra.mxu0 %v702
    %972 = vmatprep.subr.bf16.mxu0 %v701
    %973 = vmatpush1.bf16.msra.mxu0 %v700
    %974 = vmatprep.subr.bf16.mxu0 %v699
    %975 = vmatpush1.bf16.msra.mxu0 %v698
    %976 = vmatprep.subr.bf16.mxu0 %v697
    %977 = vmatpush1.bf16.msra.mxu0 %v696
    %978 = vmatprep.subr.bf16.mxu0 %v695
    %979 = vmatpush1.bf16.msra.mxu0 %v694
    %980 = vmatprep.subr.bf16.mxu0 %v693
    %981 = vmatpush1.bf16.msra.mxu0 %v692
    %982 = vmatprep.subr.bf16.mxu0 %v723
    %983 = vmatpush2.bf16.msra.mxu0 %v722
    %984 = vmatprep.subr.bf16.mxu0 %v721
    %985 = vmatpush2.bf16.msra.mxu0 %v720
    %986 = vmatprep.subr.bf16.mxu0 %v719
    %987 = vmatpush2.bf16.msra.mxu0 %v718
    %988 = vmatprep.subr.bf16.mxu0 %v717
    %989 = vmatpush2.bf16.msra.mxu0 %v716
    %990 = vmatprep.subr.bf16.mxu0 %v715
    %991 = vmatpush2.bf16.msra.mxu0 %v714
    %992 = vmatprep.subr.bf16.mxu0 %v713
    %993 = vmatpush2.bf16.msra.mxu0 %v712
    %994 = vmatprep.subr.bf16.mxu0 %v711
    %995 = vmatpush2.bf16.msra.mxu0 %v710
    %996 = vmatprep.subr.bf16.mxu0 %v709
    %997 = vmatpush2.bf16.msra.mxu0 %v708
    %998 = vmatprep.mubr.bf16.mxu0 %v233
    %999 = vmatmul.mubr.bf16.gmra.mxu0 %v232
    %v1000 = vpop.f32.mrf.mxu0
    %v1001 = vadd.f32 %v960, %v1000
    %v1002 = vpop.f32.mrf.mxu0
    %v1003 = vadd.f32 %v962, %v1002
    %v1004 = vpop.f32.mrf.mxu0
    %v1005 = vpop.f32.mrf.mxu0
    %1006 = vdwg.mxu0
    %1007 = vmatprep.subr.bf16.mxu0 %v739
    %1008 = vmatpush1.bf16.msra.mxu0 %v738
    %1009 = vmatprep.subr.bf16.mxu0 %v737
    %1010 = vmatpush1.bf16.msra.mxu0 %v736
    %1011 = vmatprep.subr.bf16.mxu0 %v735
    %1012 = vmatpush1.bf16.msra.mxu0 %v734
    %1013 = vmatprep.subr.bf16.mxu0 %v733
    %1014 = vmatpush1.bf16.msra.mxu0 %v732
    %1015 = vmatprep.subr.bf16.mxu0 %v731
    %1016 = vmatpush1.bf16.msra.mxu0 %v730
    %1017 = vmatprep.subr.bf16.mxu0 %v729
    %1018 = vmatpush1.bf16.msra.mxu0 %v728
    %1019 = vmatprep.subr.bf16.mxu0 %v727
    %1020 = vmatpush1.bf16.msra.mxu0 %v726
    %1021 = vmatprep.subr.bf16.mxu0 %v725
    %1022 = vmatpush1.bf16.msra.mxu0 %v724
    %1023 = vmatprep.subr.bf16.mxu0 %v755
    %1024 = vmatpush2.bf16.msra.mxu0 %v754
    %1025 = vmatprep.subr.bf16.mxu0 %v753
    %1026 = vmatpush2.bf16.msra.mxu0 %v752
    %1027 = vmatprep.subr.bf16.mxu0 %v751
    %1028 = vmatpush2.bf16.msra.mxu0 %v750
    %1029 = vmatprep.subr.bf16.mxu0 %v749
    %1030 = vmatpush2.bf16.msra.mxu0 %v748
    %1031 = vmatprep.subr.bf16.mxu0 %v747
    %1032 = vmatpush2.bf16.msra.mxu0 %v746
    %1033 = vmatprep.subr.bf16.mxu0 %v745
    %1034 = vmatpush2.bf16.msra.mxu0 %v744
    %1035 = vmatprep.subr.bf16.mxu0 %v743
    %1036 = vmatpush2.bf16.msra.mxu0 %v742
    %1037 = vmatprep.subr.bf16.mxu0 %v741
    %1038 = vmatpush2.bf16.msra.mxu0 %v740
    %1039 = vmatprep.mubr.bf16.mxu0 %v235
    %1040 = vmatmul.mubr.bf16.gmra.mxu0 %v234
    %v1041 = vpop.f32.mrf.mxu0
    %v1042 = vadd.f32 %v1001, %v1041
    %v1043 = vpop.f32.mrf.mxu0
    %v1044 = vadd.f32 %v1003, %v1043
    %v1045 = vpop.f32.mrf.mxu0
    %v1046 = vpop.f32.mrf.mxu0
    %1047 = vdwg.mxu0
    %v1048 = vrot.slane %v1042, 4
    %v1049 = vadd.f32 %v1042, %v1048
    %v1050 = vrot.slane %v1049, 2
    %v1051 = vadd.f32 %v1049, %v1050
    %v1052 = vrot.slane %v1051, 1
    %v1053 = vadd.f32 %v1051, %v1052
    %v1054 = vrot.slane %v1044, 4
    %v1055 = vadd.f32 %v1044, %v1054
    %v1056 = vrot.slane %v1055, 2
    %v1057 = vadd.f32 %v1055, %v1056
    %v1058 = vrot.slane %v1057, 1
    %v1059 = vadd.f32 %v1057, %v1058
    %v1060 = vrcp.pop 8.0
    %v1061 = vmul.f32 %v1053, %v1060
    %v1062 = vmul.f32 %v1059, %v1060
    %v1063 = vsub.f32 %v1042, %v1061
    %v1064 = vsub.f32 %v1044, %v1062
    %v1065 = vmul.f32 %v1063, %v1063
    %v1066 = vmul.f32 %v1064, %v1064
    %v1067 = vrot.slane %v1065, 4
    %v1068 = vadd.f32 %v1065, %v1067
    %v1069 = vrot.slane %v1068, 2
    %v1070 = vadd.f32 %v1068, %v1069
    %v1071 = vrot.slane %v1070, 1
    %v1072 = vadd.f32 %v1070, %v1071
    %v1073 = vrot.slane %v1066, 4
    %v1074 = vadd.f32 %v1066, %v1073
    %v1075 = vrot.slane %v1074, 2
    %v1076 = vadd.f32 %v1074, %v1075
    %v1077 = vrot.slane %v1076, 1
    %v1078 = vadd.f32 %v1076, %v1077
    %v1079 = vmul.f32 %v1072, %v1060
    %v1080 = vmul.f32 %v1078, %v1060
    %v1081 = vld [vmem:[%s2] sm:$0x3]
    %v1082 = vadd.f32 %v1079, 1e-05
    %v1083 = vadd.f32 %v1080, 1e-05
    %v1084 = vrsqrt.pop %v1082
    %v1085 = vrsqrt.pop %v1083
    %v1088 = vcombine.low %v1084, %v1085
    %v1090 = vunpack.c.l.s4 1966171168
    %v1091 = vunpack.c.0.s8 %v1090
    %v1092 = vlaneseq
    %v1093 = vshrl.u32 %v1092, 7
    %v1094 = vsub.s32 %v1091, %v1093
    %v1095 = vrot.slane %v1088, %v1094
    %v1097 = vunpack.c.l.s4 1966171168
    %v1098 = vunpack.c.0.s8 %v1097
    %v1099 = vlaneseq
    %v1100 = vshrl.u32 %v1099, 7
    %v1101 = vsub.s32 %v1098, %v1100
    %v1102 = vrot.slane %v1095, %v1101
    %v1104 = vmul.f32 %v1081, %v1102
    %v1106 = vlaneseq
    %v1107 = vshrl.u32 %v1106, 7
    %v1108 = vsub.s32 0, %v1107
    %v1109 = vrot.slane %v1104, %v1108
    %v1110 = vlaneseq
    %v1111 = vshrl.u32 %v1110, 7
    %v1112 = vsub.s32 1, %v1111
    %v1113 = vrot.slane %v1104, %v1112
    %v1116 = vmul.f32 %v1063, %v1109
    %v1117 = vmul.f32 %v1064, %v1113
    %v1118 = vld [vmem:[%s3] sm:$0x3]
    %v1120 = vlaneseq
    %v1121 = vshrl.u32 %v1120, 7
    %v1122 = vsub.s32 0, %v1121
    %v1123 = vrot.slane %v1118, %v1122
    %v1124 = vlaneseq
    %v1125 = vshrl.u32 %v1124, 7
    %v1126 = vsub.s32 1, %v1125
    %v1127 = vrot.slane %v1118, %v1126
    %v1130 = vadd.f32 %v1116, %v1123
    %v1131 = vadd.f32 %v1117, %v1127
    %v1132 = vmax.f32 %v1130, 0.0
    %v1133 = vmax.f32 %v1131, 0.0
    %v1134 = vpack.c.bf16 %v1132, %v1132
    %v1135 = vpack.c.bf16 %v1133, %v1133
    %v1136 = vld [vmem:[#allocation2] sm:$0xff]
    %v1137 = vld [vmem:[#allocation2 + $0x8] sm:$0xff]
    %v1138 = vld [vmem:[#allocation2 + $0x10] sm:$0xff]
    %v1139 = vld [vmem:[#allocation2 + $0x18] sm:$0xff]
    %v1140 = vld [vmem:[#allocation2 + $0x20] sm:$0xff]
    %v1141 = vld [vmem:[#allocation2 + $0x28] sm:$0xff]
    %v1142 = vld [vmem:[#allocation2 + $0x30] sm:$0xff]
    %v1143 = vld [vmem:[#allocation2 + $0x38] sm:$0xff]
    %v1144 = vld [vmem:[#allocation2 + $0x40] sm:$0xff]
    %v1145 = vld [vmem:[#allocation2 + $0x48] sm:$0xff]
    %v1146 = vld [vmem:[#allocation2 + $0x50] sm:$0xff]
    %v1147 = vld [vmem:[#allocation2 + $0x58] sm:$0xff]
    %v1148 = vld [vmem:[#allocation2 + $0x60] sm:$0xff]
    %v1149 = vld [vmem:[#allocation2 + $0x68] sm:$0xff]
    %v1150 = vld [vmem:[#allocation2 + $0x70] sm:$0xff]
    %v1151 = vld [vmem:[#allocation2 + $0x78] sm:$0xff]
    %v1152 = vld [vmem:[#allocation2 + $0x80] sm:$0xff]
    %v1153 = vld [vmem:[#allocation2 + $0x88] sm:$0xff]
    %v1154 = vld [vmem:[#allocation2 + $0x90] sm:$0xff]
    %v1155 = vld [vmem:[#allocation2 + $0x98] sm:$0xff]
    %v1156 = vld [vmem:[#allocation2 + $0xa0] sm:$0xff]
    %v1157 = vld [vmem:[#allocation2 + $0xa8] sm:$0xff]
    %v1158 = vld [vmem:[#allocation2 + $0xb0] sm:$0xff]
    %v1159 = vld [vmem:[#allocation2 + $0xb8] sm:$0xff]
    %v1160 = vld [vmem:[#allocation2 + $0xc0] sm:$0xff]
    %v1161 = vld [vmem:[#allocation2 + $0xc8] sm:$0xff]
    %v1162 = vld [vmem:[#allocation2 + $0xd0] sm:$0xff]
    %v1163 = vld [vmem:[#allocation2 + $0xd8] sm:$0xff]
    %v1164 = vld [vmem:[#allocation2 + $0xe0] sm:$0xff]
    %v1165 = vld [vmem:[#allocation2 + $0xe8] sm:$0xff]
    %v1166 = vld [vmem:[#allocation2 + $0xf0] sm:$0xff]
    %v1167 = vld [vmem:[#allocation2 + $0xf8] sm:$0xff]
    %v1200 = vunpack.c.l.b16 %v1136
    %v1201 = vunpack.c.h.b16 %v1136
    %v1202 = vunpack.c.l.b16 %v1137
    %v1203 = vunpack.c.h.b16 %v1137
    %v1204 = vunpack.c.l.b16 %v1138
    %v1205 = vunpack.c.h.b16 %v1138
    %v1206 = vunpack.c.l.b16 %v1139
    %v1207 = vunpack.c.h.b16 %v1139
    %v1208 = vunpack.c.l.b16 %v1140
    %v1209 = vunpack.c.h.b16 %v1140
    %v1210 = vunpack.c.l.b16 %v1141
    %v1211 = vunpack.c.h.b16 %v1141
    %v1212 = vunpack.c.l.b16 %v1142
    %v1213 = vunpack.c.h.b16 %v1142
    %v1214 = vunpack.c.l.b16 %v1143
    %v1215 = vunpack.c.h.b16 %v1143
    %v1216 = vunpack.c.l.b16 %v1144
    %v1217 = vunpack.c.h.b16 %v1144
    %v1218 = vunpack.c.l.b16 %v1145
    %v1219 = vunpack.c.h.b16 %v1145
    %v1220 = vunpack.c.l.b16 %v1146
    %v1221 = vunpack.c.h.b16 %v1146
    %v1222 = vunpack.c.l.b16 %v1147
    %v1223 = vunpack.c.h.b16 %v1147
    %v1224 = vunpack.c.l.b16 %v1148
    %v1225 = vunpack.c.h.b16 %v1148
    %v1226 = vunpack.c.l.b16 %v1149
    %v1227 = vunpack.c.h.b16 %v1149
    %v1228 = vunpack.c.l.b16 %v1150
    %v1229 = vunpack.c.h.b16 %v1150
    %v1230 = vunpack.c.l.b16 %v1151
    %v1231 = vunpack.c.h.b16 %v1151
    %v1232 = vunpack.c.l.b16 %v1152
    %v1233 = vunpack.c.h.b16 %v1152
    %v1234 = vunpack.c.l.b16 %v1153
    %v1235 = vunpack.c.h.b16 %v1153
    %v1236 = vunpack.c.l.b16 %v1154
    %v1237 = vunpack.c.h.b16 %v1154
    %v1238 = vunpack.c.l.b16 %v1155
    %v1239 = vunpack.c.h.b16 %v1155
    %v1240 = vunpack.c.l.b16 %v1156
    %v1241 = vunpack.c.h.b16 %v1156
    %v1242 = vunpack.c.l.b16 %v1157
    %v1243 = vunpack.c.h.b16 %v1157
    %v1244 = vunpack.c.l.b16 %v1158
    %v1245 = vunpack.c.h.b16 %v1158
    %v1246 = vunpack.c.l.b16 %v1159
    %v1247 = vunpack.c.h.b16 %v1159
    %v1248 = vunpack.c.l.b16 %v1160
    %v1249 = vunpack.c.h.b16 %v1160
    %v1250 = vunpack.c.l.b16 %v1161
    %v1251 = vunpack.c.h.b16 %v1161
    %v1252 = vunpack.c.l.b16 %v1162
    %v1253 = vunpack.c.h.b16 %v1162
    %v1254 = vunpack.c.l.b16 %v1163
    %v1255 = vunpack.c.h.b16 %v1163
    %v1256 = vunpack.c.l.b16 %v1164
    %v1257 = vunpack.c.h.b16 %v1164
    %v1258 = vunpack.c.l.b16 %v1165
    %v1259 = vunpack.c.h.b16 %v1165
    %v1260 = vunpack.c.l.b16 %v1166
    %v1261 = vunpack.c.h.b16 %v1166
    %v1262 = vunpack.c.l.b16 %v1167
    %v1263 = vunpack.c.h.b16 %v1167
    %v1264 = vpack.c.b16 %v1202, %v1200
    %v1265 = vpack.c.b16 %v1203, %v1201
    %v1266 = vpack.c.b16 %v1206, %v1204
    %v1267 = vpack.c.b16 %v1207, %v1205
    %v1268 = vpack.c.b16 %v1210, %v1208
    %v1269 = vpack.c.b16 %v1211, %v1209
    %v1270 = vpack.c.b16 %v1214, %v1212
    %v1271 = vpack.c.b16 %v1215, %v1213
    %v1272 = vpack.c.b16 %v1218, %v1216
    %v1273 = vpack.c.b16 %v1219, %v1217
    %v1274 = vpack.c.b16 %v1222, %v1220
    %v1275 = vpack.c.b16 %v1223, %v1221
    %v1276 = vpack.c.b16 %v1226, %v1224
    %v1277 = vpack.c.b16 %v1227, %v1225
    %v1278 = vpack.c.b16 %v1230, %v1228
    %v1279 = vpack.c.b16 %v1231, %v1229
    %v1280 = vpack.c.b16 %v1234, %v1232
    %v1281 = vpack.c.b16 %v1235, %v1233
    %v1282 = vpack.c.b16 %v1238, %v1236
    %v1283 = vpack.c.b16 %v1239, %v1237
    %v1284 = vpack.c.b16 %v1242, %v1240
    %v1285 = vpack.c.b16 %v1243, %v1241
    %v1286 = vpack.c.b16 %v1246, %v1244
    %v1287 = vpack.c.b16 %v1247, %v1245
    %v1288 = vpack.c.b16 %v1250, %v1248
    %v1289 = vpack.c.b16 %v1251, %v1249
    %v1290 = vpack.c.b16 %v1254, %v1252
    %v1291 = vpack.c.b16 %v1255, %v1253
    %v1292 = vpack.c.b16 %v1258, %v1256
    %v1293 = vpack.c.b16 %v1259, %v1257
    %v1294 = vpack.c.b16 %v1262, %v1260
    %v1295 = vpack.c.b16 %v1263, %v1261
    %1328 = vmatprep.subr.bf16.mxu0 %v1279
    %1329 = vmatpush1.bf16.msra.mxu0 %v1278
    %1330 = vmatprep.subr.bf16.mxu0 %v1277
    %1331 = vmatpush1.bf16.msra.mxu0 %v1276
    %1332 = vmatprep.subr.bf16.mxu0 %v1275
    %1333 = vmatpush1.bf16.msra.mxu0 %v1274
    %1334 = vmatprep.subr.bf16.mxu0 %v1273
    %1335 = vmatpush1.bf16.msra.mxu0 %v1272
    %1336 = vmatprep.subr.bf16.mxu0 %v1271
    %1337 = vmatpush1.bf16.msra.mxu0 %v1270
    %1338 = vmatprep.subr.bf16.mxu0 %v1269
    %1339 = vmatpush1.bf16.msra.mxu0 %v1268
    %1340 = vmatprep.subr.bf16.mxu0 %v1267
    %1341 = vmatpush1.bf16.msra.mxu0 %v1266
    %1342 = vmatprep.subr.bf16.mxu0 %v1265
    %1343 = vmatpush1.bf16.msra.mxu0 %v1264
    %1344 = vmatprep.subr.bf16.mxu0 %v1295
    %1345 = vmatpush2.bf16.msra.mxu0 %v1294
    %1346 = vmatprep.subr.bf16.mxu0 %v1293
    %1347 = vmatpush2.bf16.msra.mxu0 %v1292
    %1348 = vmatprep.subr.bf16.mxu0 %v1291
    %1349 = vmatpush2.bf16.msra.mxu0 %v1290
    %1350 = vmatprep.subr.bf16.mxu0 %v1289
    %1351 = vmatpush2.bf16.msra.mxu0 %v1288
    %1352 = vmatprep.subr.bf16.mxu0 %v1287
    %1353 = vmatpush2.bf16.msra.mxu0 %v1286
    %1354 = vmatprep.subr.bf16.mxu0 %v1285
    %1355 = vmatpush2.bf16.msra.mxu0 %v1284
    %1356 = vmatprep.subr.bf16.mxu0 %v1283
    %1357 = vmatpush2.bf16.msra.mxu0 %v1282
    %1358 = vmatprep.subr.bf16.mxu0 %v1281
    %1359 = vmatpush2.bf16.msra.mxu0 %v1280
    %1360 = vmatprep.mubr.bf16.mxu0 %v1135
    %1361 = vmatmul.mubr.bf16.gmra.mxu0 %v1134
    %v1362 = vpop.f32.mrf.mxu0
    %v1363 = vadd.f32 0.0, %v1362
    %v1364 = vpop.f32.mrf.mxu0
    %v1365 = vadd.f32 0.0, %v1364
    %v1366 = vpop.f32.mrf.mxu0
    %v1367 = vpop.f32.mrf.mxu0
    %1368 = vdwg.mxu0
    %v1369 = vrot.slane %v1363, 4
    %v1370 = vadd.f32 %v1363, %v1369
    %v1371 = vrot.slane %v1370, 2
    %v1372 = vadd.f32 %v1370, %v1371
    %v1373 = vrot.slane %v1372, 1
    %v1374 = vadd.f32 %v1372, %v1373
    %v1375 = vrot.slane %v1365, 4
    %v1376 = vadd.f32 %v1365, %v1375
    %v1377 = vrot.slane %v1376, 2
    %v1378 = vadd.f32 %v1376, %v1377
    %v1379 = vrot.slane %v1378, 1
    %v1380 = vadd.f32 %v1378, %v1379
    %v1381 = vmul.f32 %v1374, %v1060
    %v1382 = vmul.f32 %v1380, %v1060
    %v1383 = vsub.f32 %v1363, %v1381
    %v1384 = vsub.f32 %v1365, %v1382
    %v1385 = vmul.f32 %v1383, %v1383
    %v1386 = vmul.f32 %v1384, %v1384
    %v1387 = vrot.slane %v1385, 4
    %v1388 = vadd.f32 %v1385, %v1387
    %v1389 = vrot.slane %v1388, 2
    %v1390 = vadd.f32 %v1388, %v1389
    %v1391 = vrot.slane %v1390, 1
    %v1392 = vadd.f32 %v1390, %v1391
    %v1393 = vrot.slane %v1386, 4
    %v1394 = vadd.f32 %v1386, %v1393
    %v1395 = vrot.slane %v1394, 2
    %v1396 = vadd.f32 %v1394, %v1395
    %v1397 = vrot.slane %v1396, 1
    %v1398 = vadd.f32 %v1396, %v1397
    %v1399 = vmul.f32 %v1392, %v1060
    %v1400 = vmul.f32 %v1398, %v1060
    %v1401 = vld [vmem:[%s5] sm:$0x3]
    %v1402 = vadd.f32 %v1399, 1e-05
    %v1403 = vadd.f32 %v1400, 1e-05
    %v1404 = vrsqrt.pop %v1402
    %v1405 = vrsqrt.pop %v1403
    %v1408 = vcombine.low %v1404, %v1405
    %v1410 = vunpack.c.l.s4 1966171168
    %v1411 = vunpack.c.0.s8 %v1410
    %v1412 = vlaneseq
    %v1413 = vshrl.u32 %v1412, 7
    %v1414 = vsub.s32 %v1411, %v1413
    %v1415 = vrot.slane %v1408, %v1414
    %v1417 = vunpack.c.l.s4 1966171168
    %v1418 = vunpack.c.0.s8 %v1417
    %v1419 = vlaneseq
    %v1420 = vshrl.u32 %v1419, 7
    %v1421 = vsub.s32 %v1418, %v1420
    %v1422 = vrot.slane %v1415, %v1421
    %v1424 = vmul.f32 %v1401, %v1422
    %v1426 = vlaneseq
    %v1427 = vshrl.u32 %v1426, 7
    %v1428 = vsub.s32 0, %v1427
    %v1429 = vrot.slane %v1424, %v1428
    %v1430 = vlaneseq
    %v1431 = vshrl.u32 %v1430, 7
    %v1432 = vsub.s32 1, %v1431
    %v1433 = vrot.slane %v1424, %v1432
    %v1436 = vmul.f32 %v1383, %v1429
    %v1437 = vmul.f32 %v1384, %v1433
    %v1438 = vld [vmem:[%s6] sm:$0x3]
    %v1440 = vlaneseq
    %v1441 = vshrl.u32 %v1440, 7
    %v1442 = vsub.s32 0, %v1441
    %v1443 = vrot.slane %v1438, %v1442
    %v1444 = vlaneseq
    %v1445 = vshrl.u32 %v1444, 7
    %v1446 = vsub.s32 1, %v1445
    %v1447 = vrot.slane %v1438, %v1446
    %v1450 = vadd.f32 %v1436, %v1443
    %v1451 = vadd.f32 %v1437, %v1447
    %v1452 = vmax.f32 %v1450, 0.0
    %v1453 = vmax.f32 %v1451, 0.0
    %v1454 = vpack.c.bf16 %v1452, %v1452
    %v1455 = vpack.c.bf16 %v1453, %v1453
    %v1456 = vld [vmem:[#allocation5] sm:$0xff]
    %v1457 = vld [vmem:[#allocation5 + $0x8] sm:$0xff]
    %v1458 = vld [vmem:[#allocation5 + $0x10] sm:$0xff]
    %v1459 = vld [vmem:[#allocation5 + $0x18] sm:$0xff]
    %v1460 = vld [vmem:[#allocation5 + $0x20] sm:$0xff]
    %v1461 = vld [vmem:[#allocation5 + $0x28] sm:$0xff]
    %v1462 = vld [vmem:[#allocation5 + $0x30] sm:$0xff]
    %v1463 = vld [vmem:[#allocation5 + $0x38] sm:$0xff]
    %v1464 = vld [vmem:[#allocation5 + $0x40] sm:$0xff]
    %v1465 = vld [vmem:[#allocation5 + $0x48] sm:$0xff]
    %v1466 = vld [vmem:[#allocation5 + $0x50] sm:$0xff]
    %v1467 = vld [vmem:[#allocation5 + $0x58] sm:$0xff]
    %v1468 = vld [vmem:[#allocation5 + $0x60] sm:$0xff]
    %v1469 = vld [vmem:[#allocation5 + $0x68] sm:$0xff]
    %v1470 = vld [vmem:[#allocation5 + $0x70] sm:$0xff]
    %v1471 = vld [vmem:[#allocation5 + $0x78] sm:$0xff]
    %v1472 = vld [vmem:[#allocation5 + $0x80] sm:$0xff]
    %v1473 = vld [vmem:[#allocation5 + $0x88] sm:$0xff]
    %v1474 = vld [vmem:[#allocation5 + $0x90] sm:$0xff]
    %v1475 = vld [vmem:[#allocation5 + $0x98] sm:$0xff]
    %v1476 = vld [vmem:[#allocation5 + $0xa0] sm:$0xff]
    %v1477 = vld [vmem:[#allocation5 + $0xa8] sm:$0xff]
    %v1478 = vld [vmem:[#allocation5 + $0xb0] sm:$0xff]
    %v1479 = vld [vmem:[#allocation5 + $0xb8] sm:$0xff]
    %v1480 = vld [vmem:[#allocation5 + $0xc0] sm:$0xff]
    %v1481 = vld [vmem:[#allocation5 + $0xc8] sm:$0xff]
    %v1482 = vld [vmem:[#allocation5 + $0xd0] sm:$0xff]
    %v1483 = vld [vmem:[#allocation5 + $0xd8] sm:$0xff]
    %v1484 = vld [vmem:[#allocation5 + $0xe0] sm:$0xff]
    %v1485 = vld [vmem:[#allocation5 + $0xe8] sm:$0xff]
    %v1486 = vld [vmem:[#allocation5 + $0xf0] sm:$0xff]
    %v1487 = vld [vmem:[#allocation5 + $0xf8] sm:$0xff]
    %v1520 = vunpack.c.l.b16 %v1456
    %v1521 = vunpack.c.h.b16 %v1456
    %v1522 = vunpack.c.l.b16 %v1457
    %v1523 = vunpack.c.h.b16 %v1457
    %v1524 = vunpack.c.l.b16 %v1458
    %v1525 = vunpack.c.h.b16 %v1458
    %v1526 = vunpack.c.l.b16 %v1459
    %v1527 = vunpack.c.h.b16 %v1459
    %v1528 = vunpack.c.l.b16 %v1460
    %v1529 = vunpack.c.h.b16 %v1460
    %v1530 = vunpack.c.l.b16 %v1461
    %v1531 = vunpack.c.h.b16 %v1461
    %v1532 = vunpack.c.l.b16 %v1462
    %v1533 = vunpack.c.h.b16 %v1462
    %v1534 = vunpack.c.l.b16 %v1463
    %v1535 = vunpack.c.h.b16 %v1463
    %v1536 = vunpack.c.l.b16 %v1464
    %v1537 = vunpack.c.h.b16 %v1464
    %v1538 = vunpack.c.l.b16 %v1465
    %v1539 = vunpack.c.h.b16 %v1465
    %v1540 = vunpack.c.l.b16 %v1466
    %v1541 = vunpack.c.h.b16 %v1466
    %v1542 = vunpack.c.l.b16 %v1467
    %v1543 = vunpack.c.h.b16 %v1467
    %v1544 = vunpack.c.l.b16 %v1468
    %v1545 = vunpack.c.h.b16 %v1468
    %v1546 = vunpack.c.l.b16 %v1469
    %v1547 = vunpack.c.h.b16 %v1469
    %v1548 = vunpack.c.l.b16 %v1470
    %v1549 = vunpack.c.h.b16 %v1470
    %v1550 = vunpack.c.l.b16 %v1471
    %v1551 = vunpack.c.h.b16 %v1471
    %v1552 = vunpack.c.l.b16 %v1472
    %v1553 = vunpack.c.h.b16 %v1472
    %v1554 = vunpack.c.l.b16 %v1473
    %v1555 = vunpack.c.h.b16 %v1473
    %v1556 = vunpack.c.l.b16 %v1474
    %v1557 = vunpack.c.h.b16 %v1474
    %v1558 = vunpack.c.l.b16 %v1475
    %v1559 = vunpack.c.h.b16 %v1475
    %v1560 = vunpack.c.l.b16 %v1476
    %v1561 = vunpack.c.h.b16 %v1476
    %v1562 = vunpack.c.l.b16 %v1477
    %v1563 = vunpack.c.h.b16 %v1477
    %v1564 = vunpack.c.l.b16 %v1478
    %v1565 = vunpack.c.h.b16 %v1478
    %v1566 = vunpack.c.l.b16 %v1479
    %v1567 = vunpack.c.h.b16 %v1479
    %v1568 = vunpack.c.l.b16 %v1480
    %v1569 = vunpack.c.h.b16 %v1480
    %v1570 = vunpack.c.l.b16 %v1481
    %v1571 = vunpack.c.h.b16 %v1481
    %v1572 = vunpack.c.l.b16 %v1482
    %v1573 = vunpack.c.h.b16 %v1482
    %v1574 = vunpack.c.l.b16 %v1483
    %v1575 = vunpack.c.h.b16 %v1483
    %v1576 = vunpack.c.l.b16 %v1484
    %v1577 = vunpack.c.h.b16 %v1484
    %v1578 = vunpack.c.l.b16 %v1485
    %v1579 = vunpack.c.h.b16 %v1485
    %v1580 = vunpack.c.l.b16 %v1486
    %v1581 = vunpack.c.h.b16 %v1486
    %v1582 = vunpack.c.l.b16 %v1487
    %v1583 = vunpack.c.h.b16 %v1487
    %v1584 = vpack.c.b16 %v1522, %v1520
    %v1585 = vpack.c.b16 %v1523, %v1521
    %v1586 = vpack.c.b16 %v1526, %v1524
    %v1587 = vpack.c.b16 %v1527, %v1525
    %v1588 = vpack.c.b16 %v1530, %v1528
    %v1589 = vpack.c.b16 %v1531, %v1529
    %v1590 = vpack.c.b16 %v1534, %v1532
    %v1591 = vpack.c.b16 %v1535, %v1533
    %v1592 = vpack.c.b16 %v1538, %v1536
    %v1593 = vpack.c.b16 %v1539, %v1537
    %v1594 = vpack.c.b16 %v1542, %v1540
    %v1595 = vpack.c.b16 %v1543, %v1541
    %v1596 = vpack.c.b16 %v1546, %v1544
    %v1597 = vpack.c.b16 %v1547, %v1545
    %v1598 = vpack.c.b16 %v1550, %v1548
    %v1599 = vpack.c.b16 %v1551, %v1549
    %v1600 = vpack.c.b16 %v1554, %v1552
    %v1601 = vpack.c.b16 %v1555, %v1553
    %v1602 = vpack.c.b16 %v1558, %v1556
    %v1603 = vpack.c.b16 %v1559, %v1557
    %v1604 = vpack.c.b16 %v1562, %v1560
    %v1605 = vpack.c.b16 %v1563, %v1561
    %v1606 = vpack.c.b16 %v1566, %v1564
    %v1607 = vpack.c.b16 %v1567, %v1565
    %v1608 = vpack.c.b16 %v1570, %v1568
    %v1609 = vpack.c.b16 %v1571, %v1569
    %v1610 = vpack.c.b16 %v1574, %v1572
    %v1611 = vpack.c.b16 %v1575, %v1573
    %v1612 = vpack.c.b16 %v1578, %v1576
    %v1613 = vpack.c.b16 %v1579, %v1577
    %v1614 = vpack.c.b16 %v1582, %v1580
    %v1615 = vpack.c.b16 %v1583, %v1581
    %1648 = vmatprep.subr.bf16.mxu0 %v1599
    %1649 = vmatpush1.bf16.msra.mxu0 %v1598
    %1650 = vmatprep.subr.bf16.mxu0 %v1597
    %1651 = vmatpush1.bf16.msra.mxu0 %v1596
    %1652 = vmatprep.subr.bf16.mxu0 %v1595
    %1653 = vmatpush1.bf16.msra.mxu0 %v1594
    %1654 = vmatprep.subr.bf16.mxu0 %v1593
    %1655 = vmatpush1.bf16.msra.mxu0 %v1592
    %1656 = vmatprep.subr.bf16.mxu0 %v1591
    %1657 = vmatpush1.bf16.msra.mxu0 %v1590
    %1658 = vmatprep.subr.bf16.mxu0 %v1589
    %1659 = vmatpush1.bf16.msra.mxu0 %v1588
    %1660 = vmatprep.subr.bf16.mxu0 %v1587
    %1661 = vmatpush1.bf16.msra.mxu0 %v1586
    %1662 = vmatprep.subr.bf16.mxu0 %v1585
    %1663 = vmatpush1.bf16.msra.mxu0 %v1584
    %1664 = vmatprep.subr.bf16.mxu0 %v1615
    %1665 = vmatpush2.bf16.msra.mxu0 %v1614
    %1666 = vmatprep.subr.bf16.mxu0 %v1613
    %1667 = vmatpush2.bf16.msra.mxu0 %v1612
    %1668 = vmatprep.subr.bf16.mxu0 %v1611
    %1669 = vmatpush2.bf16.msra.mxu0 %v1610
    %1670 = vmatprep.subr.bf16.mxu0 %v1609
    %1671 = vmatpush2.bf16.msra.mxu0 %v1608
    %1672 = vmatprep.subr.bf16.mxu0 %v1607
    %1673 = vmatpush2.bf16.msra.mxu0 %v1606
    %1674 = vmatprep.subr.bf16.mxu0 %v1605
    %1675 = vmatpush2.bf16.msra.mxu0 %v1604
    %1676 = vmatprep.subr.bf16.mxu0 %v1603
    %1677 = vmatpush2.bf16.msra.mxu0 %v1602
    %1678 = vmatprep.subr.bf16.mxu0 %v1601
    %1679 = vmatpush2.bf16.msra.mxu0 %v1600
    %1680 = vmatprep.mubr.bf16.mxu0 %v1455
    %1681 = vmatmul.mubr.bf16.gmra.mxu0 %v1454
    %v1682 = vpop.f32.mrf.mxu0
    %v1683 = vadd.f32 0.0, %v1682
    %v1684 = vpop.f32.mrf.mxu0
    %v1685 = vadd.f32 0.0, %v1684
    %v1686 = vpop.f32.mrf.mxu0
    %v1687 = vpop.f32.mrf.mxu0
    %1688 = vdwg.mxu0
    %v1689 = vrot.slane %v1683, 4
    %v1690 = vadd.f32 %v1683, %v1689
    %v1691 = vrot.slane %v1690, 2
    %v1692 = vadd.f32 %v1690, %v1691
    %v1693 = vrot.slane %v1692, 1
    %v1694 = vadd.f32 %v1692, %v1693
    %v1695 = vrot.slane %v1685, 4
    %v1696 = vadd.f32 %v1685, %v1695
    %v1697 = vrot.slane %v1696, 2
    %v1698 = vadd.f32 %v1696, %v1697
    %v1699 = vrot.slane %v1698, 1
    %v1700 = vadd.f32 %v1698, %v1699
    %v1701 = vmul.f32 %v1694, %v1060
    %v1702 = vmul.f32 %v1700, %v1060
    %v1703 = vsub.f32 %v1683, %v1701
    %v1704 = vsub.f32 %v1685, %v1702
    %v1705 = vmul.f32 %v1703, %v1703
    %v1706 = vmul.f32 %v1704, %v1704
    %v1707 = vrot.slane %v1705, 4
    %v1708 = vadd.f32 %v1705, %v1707
    %v1709 = vrot.slane %v1708, 2
    %v1710 = vadd.f32 %v1708, %v1709
    %v1711 = vrot.slane %v1710, 1
    %v1712 = vadd.f32 %v1710, %v1711
    %v1713 = vrot.slane %v1706, 4
    %v1714 = vadd.f32 %v1706, %v1713
    %v1715 = vrot.slane %v1714, 2
    %v1716 = vadd.f32 %v1714, %v1715
    %v1717 = vrot.slane %v1716, 1
    %v1718 = vadd.f32 %v1716, %v1717
    %v1719 = vmul.f32 %v1712, %v1060
    %v1720 = vmul.f32 %v1718, %v1060
    %v1721 = vld [vmem:[%s8] sm:$0x3]
    %v1722 = vadd.f32 %v1719, 1e-05
    %v1723 = vadd.f32 %v1720, 1e-05
    %v1724 = vrsqrt.pop %v1722
    %v1725 = vrsqrt.pop %v1723
    %v1728 = vcombine.low %v1724, %v1725
    %v1730 = vunpack.c.l.s4 1966171168
    %v1731 = vunpack.c.0.s8 %v1730
    %v1732 = vlaneseq
    %v1733 = vshrl.u32 %v1732, 7
    %v1734 = vsub.s32 %v1731, %v1733
    %v1735 = vrot.slane %v1728, %v1734
    %v1737 = vunpack.c.l.s4 1966171168
    %v1738 = vunpack.c.0.s8 %v1737
    %v1739 = vlaneseq
    %v1740 = vshrl.u32 %v1739, 7
    %v1741 = vsub.s32 %v1738, %v1740
    %v1742 = vrot.slane %v1735, %v1741
    %v1744 = vmul.f32 %v1721, %v1742
    %v1746 = vlaneseq
    %v1747 = vshrl.u32 %v1746, 7
    %v1748 = vsub.s32 0, %v1747
    %v1749 = vrot.slane %v1744, %v1748
    %v1750 = vlaneseq
    %v1751 = vshrl.u32 %v1750, 7
    %v1752 = vsub.s32 1, %v1751
    %v1753 = vrot.slane %v1744, %v1752
    %v1756 = vmul.f32 %v1703, %v1749
    %v1757 = vmul.f32 %v1704, %v1753
    %v1758 = vld [vmem:[%s9] sm:$0x3]
    %v1760 = vlaneseq
    %v1761 = vshrl.u32 %v1760, 7
    %v1762 = vsub.s32 0, %v1761
    %v1763 = vrot.slane %v1758, %v1762
    %v1764 = vlaneseq
    %v1765 = vshrl.u32 %v1764, 7
    %v1766 = vsub.s32 1, %v1765
    %v1767 = vrot.slane %v1758, %v1766
    %v1770 = vadd.f32 %v1756, %v1763
    %v1771 = vadd.f32 %v1757, %v1767
    %v1772 = vmax.f32 %v1770, 0.0
    %v1773 = vmax.f32 %v1771, 0.0
    %v1774 = vpack.c.bf16 %v1772, %v1772
    %v1775 = vpack.c.bf16 %v1773, %v1773
    %v1776 = vld [vmem:[#allocation7] sm:$0xf]
    %v1777 = vld [vmem:[#allocation7 + $0x4] sm:$0xf]
    %v1778 = vld [vmem:[#allocation7 + $0x8] sm:$0xf]
    %v1779 = vld [vmem:[#allocation7 + $0xc] sm:$0xf]
    %v1780 = vld [vmem:[#allocation7 + $0x10] sm:$0xf]
    %v1781 = vld [vmem:[#allocation7 + $0x14] sm:$0xf]
    %v1782 = vld [vmem:[#allocation7 + $0x18] sm:$0xf]
    %v1783 = vld [vmem:[#allocation7 + $0x1c] sm:$0xf]
    %v1784 = vld [vmem:[#allocation7 + $0x20] sm:$0xf]
    %v1785 = vld [vmem:[#allocation7 + $0x24] sm:$0xf]
    %v1786 = vld [vmem:[#allocation7 + $0x28] sm:$0xf]
    %v1787 = vld [vmem:[#allocation7 + $0x2c] sm:$0xf]
    %v1788 = vld [vmem:[#allocation7 + $0x30] sm:$0xf]
    %v1789 = vld [vmem:[#allocation7 + $0x34] sm:$0xf]
    %v1790 = vld [vmem:[#allocation7 + $0x38] sm:$0xf]
    %v1791 = vld [vmem:[#allocation7 + $0x3c] sm:$0xf]
    %v1792 = vld [vmem:[#allocation7 + $0x40] sm:$0xf]
    %v1793 = vld [vmem:[#allocation7 + $0x44] sm:$0xf]
    %v1794 = vld [vmem:[#allocation7 + $0x48] sm:$0xf]
    %v1795 = vld [vmem:[#allocation7 + $0x4c] sm:$0xf]
    %v1796 = vld [vmem:[#allocation7 + $0x50] sm:$0xf]
    %v1797 = vld [vmem:[#allocation7 + $0x54] sm:$0xf]
    %v1798 = vld [vmem:[#allocation7 + $0x58] sm:$0xf]
    %v1799 = vld [vmem:[#allocation7 + $0x5c] sm:$0xf]
    %v1800 = vld [vmem:[#allocation7 + $0x60] sm:$0xf]
    %v1801 = vld [vmem:[#allocation7 + $0x64] sm:$0xf]
    %v1802 = vld [vmem:[#allocation7 + $0x68] sm:$0xf]
    %v1803 = vld [vmem:[#allocation7 + $0x6c] sm:$0xf]
    %v1804 = vld [vmem:[#allocation7 + $0x70] sm:$0xf]
    %v1805 = vld [vmem:[#allocation7 + $0x74] sm:$0xf]
    %v1806 = vld [vmem:[#allocation7 + $0x78] sm:$0xf]
    %v1807 = vld [vmem:[#allocation7 + $0x7c] sm:$0xf]
    %v1808 = vld [vmem:[%s11] sm:$0x1]
    %v1810 = vlaneseq
    %v1811 = vshrl.u32 %v1810, 7
    %v1812 = vsub.s32 0, %v1811
    %v1813 = vrot.slane %v1808, %v1812
    %v1847 = vunpack.c.l.b16 %v1776
    %v1848 = vunpack.c.l.b16 %v1777
    %v1849 = vunpack.c.l.b16 %v1778
    %v1850 = vunpack.c.l.b16 %v1779
    %v1851 = vunpack.c.l.b16 %v1780
    %v1852 = vunpack.c.l.b16 %v1781
    %v1853 = vunpack.c.l.b16 %v1782
    %v1854 = vunpack.c.l.b16 %v1783
    %v1855 = vunpack.c.l.b16 %v1784
    %v1856 = vunpack.c.l.b16 %v1785
    %v1857 = vunpack.c.l.b16 %v1786
    %v1858 = vunpack.c.l.b16 %v1787
    %v1859 = vunpack.c.l.b16 %v1788
    %v1860 = vunpack.c.l.b16 %v1789
    %v1861 = vunpack.c.l.b16 %v1790
    %v1862 = vunpack.c.l.b16 %v1791
    %v1863 = vunpack.c.l.b16 %v1792
    %v1864 = vunpack.c.l.b16 %v1793
    %v1865 = vunpack.c.l.b16 %v1794
    %v1866 = vunpack.c.l.b16 %v1795
    %v1867 = vunpack.c.l.b16 %v1796
    %v1868 = vunpack.c.l.b16 %v1797
    %v1869 = vunpack.c.l.b16 %v1798
    %v1870 = vunpack.c.l.b16 %v1799
    %v1871 = vunpack.c.l.b16 %v1800
    %v1872 = vunpack.c.l.b16 %v1801
    %v1873 = vunpack.c.l.b16 %v1802
    %v1874 = vunpack.c.l.b16 %v1803
    %v1875 = vunpack.c.l.b16 %v1804
    %v1876 = vunpack.c.l.b16 %v1805
    %v1877 = vunpack.c.l.b16 %v1806
    %v1878 = vunpack.c.l.b16 %v1807
    %v1879 = vpack.c.b16 %v1848, %v1847
    %v1880 = vpack.c.b16 %v1850, %v1849
    %v1881 = vpack.c.b16 %v1852, %v1851
    %v1882 = vpack.c.b16 %v1854, %v1853
    %v1883 = vpack.c.b16 %v1856, %v1855
    %v1884 = vpack.c.b16 %v1858, %v1857
    %v1885 = vpack.c.b16 %v1860, %v1859
    %v1886 = vpack.c.b16 %v1862, %v1861
    %v1887 = vpack.c.b16 %v1864, %v1863
    %v1888 = vpack.c.b16 %v1866, %v1865
    %v1889 = vpack.c.b16 %v1868, %v1867
    %v1890 = vpack.c.b16 %v1870, %v1869
    %v1891 = vpack.c.b16 %v1872, %v1871
    %v1892 = vpack.c.b16 %v1874, %v1873
    %v1893 = vpack.c.b16 %v1876, %v1875
    %v1894 = vpack.c.b16 %v1878, %v1877
    %1911 = vmatprep.subr.bf16.mxu0 0
    %1912 = vmatpush1.bf16.msra.mxu0 %v1886
    %1913 = vmatprep.subr.bf16.mxu0 0
    %1914 = vmatpush1.bf16.msra.mxu0 %v1885
    %1915 = vmatprep.subr.bf16.mxu0 0
    %1916 = vmatpush1.bf16.msra.mxu0 %v1884
    %1917 = vmatprep.subr.bf16.mxu0 0
    %1918 = vmatpush1.bf16.msra.mxu0 %v1883
    %1919 = vmatprep.subr.bf16.mxu0 0
    %1920 = vmatpush1.bf16.msra.mxu0 %v1882
    %1921 = vmatprep.subr.bf16.mxu0 0
    %1922 = vmatpush1.bf16.msra.mxu0 %v1881
    %1923 = vmatprep.subr.bf16.mxu0 0
    %1924 = vmatpush1.bf16.msra.mxu0 %v1880
    %1925 = vmatprep.subr.bf16.mxu0 0
    %1926 = vmatpush1.bf16.msra.mxu0 %v1879
    %1927 = vmatprep.subr.bf16.mxu0 0
    %1928 = vmatpush2.bf16.msra.mxu0 %v1894
    %1929 = vmatprep.subr.bf16.mxu0 0
    %1930 = vmatpush2.bf16.msra.mxu0 %v1893
    %1931 = vmatprep.subr.bf16.mxu0 0
    %1932 = vmatpush2.bf16.msra.mxu0 %v1892
    %1933 = vmatprep.subr.bf16.mxu0 0
    %1934 = vmatpush2.bf16.msra.mxu0 %v1891
    %1935 = vmatprep.subr.bf16.mxu0 0
    %1936 = vmatpush2.bf16.msra.mxu0 %v1890
    %1937 = vmatprep.subr.bf16.mxu0 0
    %1938 = vmatpush2.bf16.msra.mxu0 %v1889
    %1939 = vmatprep.subr.bf16.mxu0 0
    %1940 = vmatpush2.bf16.msra.mxu0 %v1888
    %1941 = vmatprep.subr.bf16.mxu0 0
    %1942 = vmatpush2.bf16.msra.mxu0 %v1887
    %1943 = vmatprep.mubr.bf16.mxu0 %v1775
    %1944 = vmatmul.mubr.bf16.gmra.mxu0 %v1774
    %v1945 = vpop.f32.mrf.mxu0
    %v1946 = vadd.f32 %v1813, %v1945
    %v1947 = vpop.f32.mrf.mxu0
    %v1948 = vpop.f32.mrf.mxu0
    %v1949 = vpop.f32.mrf.mxu0
    %1950 = vdwg.mxu0
    %1951 = vst [vmem:[#allocation8] sm:$0xff] %v1946
    // Predicated region
    $region62: #{fc_forward.1} parent=1 // pred_check
      _
    $region63: #{fc_forward.1} parent=1 // pred_check_branch
      %1953 = sbr.rel (0) target = $region65
    $region64: #{fc_forward.1} parent=1 // pred_region
      %s1955 = ssub.s32 128, 128
      %1956 = vsyncadd [#allocation4], %s1955
      %s1958 = sshll.u32 [#allocation8], 4
      %s1959 = int_to_ptr.vmem [resolvable:$true] %s1958
      %1961 = dma.vmem_to_hbm [thread:$0]  %s1959, 128, %s12, [#allocation4]
    $region65: #{fc_forward.1} parent=1 // pred_fallthru
      _
    // Predicated region
    $region66: #{fc_forward.1} parent=1 // pred_check
      _
    $region67: #{fc_forward.1} parent=1 // pred_check_branch
      %1963 = sbr.rel (0) target = $region69
    $region68: #{fc_forward.1} parent=1 // pred_region
      %1964 = dma.done [#allocation4], 128
    $region69: #{fc_forward.1} parent=1 // pred_fallthru
      _
    %1965 = vsyncpa [#allocation3], 1
    %1966 = vsyncpa [#allocation6], 1
    %1967 = vsyncpa [#allocation4], 1

</llo_original>
